<compile_context>
chip_gen: v5e
topology: v5e:2x2
jax: 0.10.0
libtpu: 0.0.40
codegen_flags: <defaults>
</compile_context>

<pallas_src>
import jax
import jax.numpy as jnp
from jax.experimental import pallas as pl
from jax.experimental.pallas import tpu as pltpu

B, CIN, H, W = 2, 3, 32, 32
COUT, KH, KW = 16, 3, 3
HW = H * W                        # 1024
K_CONV = CIN * KH * KW            # 27
FC_IN, FC_OUT = COUT * HW, 10     # 16384, 10
BN_EPS = 1e-5


# ----------------------------------------------------------------------------
# Single fused kernel: conv (im2col matmul) + BN(batch stats) + ReLU + Linear
# ----------------------------------------------------------------------------
def fused_kernel(patches_ref, wc_ref, gamma_ref, beta_ref,
                 wx_ref, msk_ref, ssel_ref, bfc_ref, out_ref):
    # ---- Conv2d as one lane-dense MXU matmul --------------------------------
    # [16, 27] @ [27, B*H*W] -> [16, 2048]; columns ordered (b, h, w), i.e.
    # already in NCHW-flatten order for the fc layer.
    # Conv bias omitted: exactly cancelled by train-mode BN mean subtraction.
    y = jnp.dot(wc_ref[...], patches_ref[...],
                preferred_element_type=jnp.float32)              # [16, 2048]

    # ---- BatchNorm2d (training mode, biased batch stats) + ReLU -------------
    # Single pass over y: per-channel sum and sum-of-squares on the lane axis.
    n = float(B * HW)
    s = jnp.sum(y, axis=1, keepdims=True)                        # [16, 1]
    ss = jnp.sum(y * y, axis=1, keepdims=True)                   # [16, 1]
    mean = s / n
    var = ss / n - mean * mean
    scale = jax.lax.rsqrt(var + BN_EPS) * gamma_ref[...]         # [16, 1]
    shift = beta_ref[...] - mean * scale                         # [16, 1]
    a = jnp.maximum(y * scale + shift, 0.0)                      # [16, 2048]

    # ---- Linear(16*32*32 -> 10) ---------------------------------------------
    # out[b, o] = sum_{c,hw} a[c, b*HW+hw] * fc_w[o, c*HW+hw]
    # Per batch: contract hw on the MXU -> r[c, o*16+c'], keep the c == c'
    # diagonal with a precomputed mask, sum over sublanes, then a tiny selector
    # matmul sums each o-block of 16 lanes.
    wx = wx_ref[...]                                             # [1024, 160]
    msk = msk_ref[...]                                           # [16, 160]
    cols = []
    for b in range(B):                                           # B = 2, static unroll
        ab = a[:, b * HW:(b + 1) * HW]                           # [16, 1024]
        r = jnp.dot(ab, wx, preferred_element_type=jnp.float32)  # [16, 160]
        cols.append(jnp.sum(r * msk, axis=0, keepdims=True))     # [1, 160]
    col = jnp.concatenate(cols, axis=0)                          # [2, 160]
    out = jnp.dot(col, ssel_ref[...],
                  preferred_element_type=jnp.float32)            # [2, 10]
    out_ref[...] = out + bfc_ref[...]


def fused_forward(patches_t, wc, gamma, beta, wx, msk, ssel, bfc):
    vmem = pl.BlockSpec(memory_space=pltpu.MemorySpace.VMEM)
    return pl.pallas_call(
        fused_kernel,
        out_shape=jax.ShapeDtypeStruct((B, FC_OUT), jnp.float32),
        in_specs=[vmem] * 8,
        out_specs=vmem,
    )(patches_t, wc, gamma, beta, wx, msk, ssel, bfc)


# ----------------------------------------------------------------------------
# Glue: im2col (transposed) and static weight packing — pure JAX layout work
# ----------------------------------------------------------------------------
def im2col_t(x_nchw):
    # [B, 3, 32, 32] -> [27, B*H*W]; rows ordered (ci, kh, kw) to match
    # conv_w.reshape(COUT, -1); columns ordered (b, h, w) = NCHW flatten order.
    xp = jnp.pad(x_nchw, ((0, 0), (0, 0), (1, 1), (1, 1)))
    taps = [xp[:, :, kh:kh + H, kw:kw + W]
            for kh in range(KH) for kw in range(KW)]             # each [B, 3, H, W]
    p = jnp.stack(taps, axis=2)                                  # [B, 3, 9, H, W]
    p = jnp.transpose(p, (1, 2, 0, 3, 4))                        # [3, 9, B, H, W]
    return p.reshape(K_CONV, B * HW)                             # [27, 2048]


def forward(x_nchw, params):
    conv_w, conv_b, bn_g, bn_b, fc_w, fc_b = params
    del conv_b  # mathematically a no-op under train-mode BatchNorm
    patches_t = im2col_t(x_nchw)                                 # [27, 2048]
    wc = conv_w.reshape(COUT, K_CONV)                            # [16, 27]
    # fc weight packed so hw sits on the MXU contraction axis:
    #   wx[hw, o*16 + c] = fc_w[o, c*HW + hw]
    wx = jnp.transpose(fc_w.reshape(FC_OUT, COUT, HW),
                       (2, 0, 1)).reshape(HW, FC_OUT * COUT)     # [1024, 160]
    # diagonal (c == c') mask and per-o block-sum selector (tiny constants)
    msk = (jnp.arange(FC_OUT * COUT)[None, :] % COUT
           == jnp.arange(COUT)[:, None]).astype(jnp.float32)     # [16, 160]
    ssel = (jnp.arange(FC_OUT * COUT)[:, None] // COUT
            == jnp.arange(FC_OUT)[None, :]).astype(jnp.float32)  # [160, 10]
    return fused_forward(patches_t, wc,
                         bn_g.reshape(COUT, 1), bn_b.reshape(COUT, 1),
                         wx, msk, ssel, fc_b.reshape(1, FC_OUT))


def reference(x_nchw, params):
    conv_w, conv_b, bn_g, bn_b, fc_w, fc_b = params
    y = jax.lax.conv_general_dilated(
        x_nchw, conv_w, window_strides=(1, 1), padding=((1, 1), (1, 1)),
        dimension_numbers=("NCHW", "OIHW", "NCHW")) + conv_b[None, :, None, None]
    mean = jnp.mean(y, axis=(0, 2, 3), keepdims=True)
    var = jnp.mean((y - mean) ** 2, axis=(0, 2, 3), keepdims=True)
    y = (y - mean) * jax.lax.rsqrt(var + BN_EPS)
    y = y * bn_g[None, :, None, None] + bn_b[None, :, None, None]
    y = jnp.maximum(y, 0.0)
    return y.reshape(B, -1) @ fc_w.T + fc_b


if __name__ == "__main__":
    key = jax.random.PRNGKey(0)
    kx, kw1, kb1, kg, kbeta, kw2, kb2 = jax.random.split(key, 7)

    x = jax.random.normal(kx, (B, CIN, H, W), jnp.float32)

    conv_w = jax.random.normal(kw1, (COUT, CIN, KH, KW), jnp.float32) * 0.1
    conv_b = jax.random.normal(kb1, (COUT,), jnp.float32) * 0.1
    bn_g = 1.0 + 0.1 * jax.random.normal(kg, (COUT,), jnp.float32)
    bn_b = 0.1 * jax.random.normal(kbeta, (COUT,), jnp.float32)
    fc_w = jax.random.normal(kw2, (FC_OUT, FC_IN), jnp.float32) * 0.01
    fc_b = jax.random.normal(kb2, (FC_OUT,), jnp.float32) * 0.1
    params = (conv_w, conv_b, bn_g, bn_b, fc_w, fc_b)

    fwd = jax.jit(forward)
    out = jax.block_until_ready(fwd(x, params))
    ref = jax.block_until_ready(reference(x, params))
    assert out.shape == (B, FC_OUT)
    assert jnp.allclose(out, ref, atol=1e-3, rtol=1e-3), (
        f"max abs err {jnp.max(jnp.abs(out - ref))}")
    print("KERNEL_OK")
</pallas_src>

<mosaic_0001>
module attributes {stable_mosaic.version = 11 : i64} {
  func.func @fused_kernel(%arg0: memref<27x2048xf32, #tpu.memory_space<vmem>>, %arg1: memref<16x27xf32, #tpu.memory_space<vmem>>, %arg2: memref<16x1xf32, #tpu.memory_space<vmem>>, %arg3: memref<16x1xf32, #tpu.memory_space<vmem>>, %arg4: memref<1024x160xf32, #tpu.memory_space<vmem>>, %arg5: memref<16x160xf32, #tpu.memory_space<vmem>>, %arg6: memref<160x10xf32, #tpu.memory_space<vmem>>, %arg7: memref<1x10xf32, #tpu.memory_space<vmem>>, %arg8: memref<2x10xf32, #tpu.memory_space<vmem>>) attributes {dimension_semantics = [], scalar_prefetch = 0 : i64, scratch_operands = 0 : i64, tpu.core_type = #tpu.core_type<tc>} {
    %c0 = arith.constant 0 : index
    %c0_0 = arith.constant 0 : index
    %0 = vector.load %arg1[%c0, %c0_0] : memref<16x27xf32, #tpu.memory_space<vmem>>, vector<16x27xf32>
    %c0_1 = arith.constant 0 : index
    %c0_2 = arith.constant 0 : index
    %1 = vector.load %arg0[%c0_1, %c0_2] : memref<27x2048xf32, #tpu.memory_space<vmem>>, vector<27x2048xf32>
    %cst = arith.constant dense<0.000000e+00> : vector<16x2048xf32>
    %2 = tpu.matmul %0, %1, %cst {dimension_numbers = #tpu.dot_dimension_numbers<[1], [0], [0], [1], [0, 0, 1, 1], [], []>} : vector<16x27xf32>, vector<27x2048xf32>, vector<16x2048xf32> -> vector<16x2048xf32>
    %cst_3 = arith.constant dense<0.000000e+00> : vector<16xf32>
    %3 = vector.multi_reduction <add>, %2, %cst_3 [1] : vector<16x2048xf32> to vector<16xf32>
    %4 = vector.shape_cast %3 : vector<16xf32> to vector<16x1xf32>
    %5 = arith.mulf %2, %2 : vector<16x2048xf32>
    %cst_4 = arith.constant dense<0.000000e+00> : vector<16xf32>
    %6 = vector.multi_reduction <add>, %5, %cst_4 [1] : vector<16x2048xf32> to vector<16xf32>
    %7 = vector.shape_cast %6 : vector<16xf32> to vector<16x1xf32>
    %cst_5 = arith.constant 2.048000e+03 : f32
    %8 = vector.broadcast %cst_5 : f32 to vector<16x1xf32>
    %9 = arith.divf %4, %8 : vector<16x1xf32>
    %cst_6 = arith.constant 2.048000e+03 : f32
    %10 = vector.broadcast %cst_6 : f32 to vector<16x1xf32>
    %11 = arith.divf %7, %10 : vector<16x1xf32>
    %12 = arith.mulf %9, %9 : vector<16x1xf32>
    %13 = arith.subf %11, %12 : vector<16x1xf32>
    %cst_7 = arith.constant 9.99999974E-6 : f32
    %14 = vector.broadcast %cst_7 : f32 to vector<16x1xf32>
    %15 = arith.addf %13, %14 : vector<16x1xf32>
    %16 = math.rsqrt %15 : vector<16x1xf32>
    %c0_8 = arith.constant 0 : index
    %c0_9 = arith.constant 0 : index
    %17 = vector.load %arg2[%c0_8, %c0_9] : memref<16x1xf32, #tpu.memory_space<vmem>>, vector<16x1xf32>
    %18 = arith.mulf %16, %17 : vector<16x1xf32>
    %c0_10 = arith.constant 0 : index
    %c0_11 = arith.constant 0 : index
    %19 = vector.load %arg3[%c0_10, %c0_11] : memref<16x1xf32, #tpu.memory_space<vmem>>, vector<16x1xf32>
    %20 = arith.mulf %9, %18 : vector<16x1xf32>
    %21 = arith.subf %19, %20 : vector<16x1xf32>
    %22 = vector.broadcast %18 : vector<16x1xf32> to vector<16x2048xf32>
    %23 = arith.mulf %2, %22 : vector<16x2048xf32>
    %24 = vector.broadcast %21 : vector<16x1xf32> to vector<16x2048xf32>
    %25 = arith.addf %23, %24 : vector<16x2048xf32>
    %cst_12 = arith.constant 0.000000e+00 : f32
    %26 = vector.broadcast %cst_12 : f32 to vector<16x2048xf32>
    %27 = arith.maximumf %25, %26 : vector<16x2048xf32>
    %c0_13 = arith.constant 0 : index
    %c0_14 = arith.constant 0 : index
    %28 = vector.load %arg4[%c0_13, %c0_14] : memref<1024x160xf32, #tpu.memory_space<vmem>>, vector<1024x160xf32>
    %c0_15 = arith.constant 0 : index
    %c0_16 = arith.constant 0 : index
    %29 = vector.load %arg5[%c0_15, %c0_16] : memref<16x160xf32, #tpu.memory_space<vmem>>, vector<16x160xf32>
    %30 = vector.extract_strided_slice %27 {offsets = [0, 0], sizes = [16, 1024], strides = [1, 1]} : vector<16x2048xf32> to vector<16x1024xf32>
    %cst_17 = arith.constant dense<0.000000e+00> : vector<16x160xf32>
    %31 = tpu.matmul %30, %28, %cst_17 {dimension_numbers = #tpu.dot_dimension_numbers<[1], [0], [0], [1], [0, 0, 1, 1], [], []>} : vector<16x1024xf32>, vector<1024x160xf32>, vector<16x160xf32> -> vector<16x160xf32>
    %32 = arith.mulf %31, %29 : vector<16x160xf32>
    %cst_18 = arith.constant dense<0.000000e+00> : vector<160xf32>
    %33 = vector.multi_reduction <add>, %32, %cst_18 [0] : vector<16x160xf32> to vector<160xf32>
    %34 = vector.shape_cast %33 : vector<160xf32> to vector<1x160xf32>
    %35 = vector.extract_strided_slice %27 {offsets = [0, 1024], sizes = [16, 1024], strides = [1, 1]} : vector<16x2048xf32> to vector<16x1024xf32>
    %cst_19 = arith.constant dense<0.000000e+00> : vector<16x160xf32>
    %36 = tpu.matmul %35, %28, %cst_19 {dimension_numbers = #tpu.dot_dimension_numbers<[1], [0], [0], [1], [0, 0, 1, 1], [], []>} : vector<16x1024xf32>, vector<1024x160xf32>, vector<16x160xf32> -> vector<16x160xf32>
    %37 = arith.mulf %36, %29 : vector<16x160xf32>
    %cst_20 = arith.constant dense<0.000000e+00> : vector<160xf32>
    %38 = vector.multi_reduction <add>, %37, %cst_20 [0] : vector<16x160xf32> to vector<160xf32>
    %39 = vector.shape_cast %38 : vector<160xf32> to vector<1x160xf32>
    %40 = tpu.concatenate %34, %39 in 0 : vector<1x160xf32>, vector<1x160xf32> -> vector<2x160xf32>
    %c0_21 = arith.constant 0 : index
    %c0_22 = arith.constant 0 : index
    %41 = vector.load %arg6[%c0_21, %c0_22] : memref<160x10xf32, #tpu.memory_space<vmem>>, vector<160x10xf32>
    %cst_23 = arith.constant dense<0.000000e+00> : vector<2x10xf32>
    %42 = tpu.matmul %40, %41, %cst_23 {dimension_numbers = #tpu.dot_dimension_numbers<[1], [0], [0], [1], [0, 0, 1, 1], [], []>} : vector<2x160xf32>, vector<160x10xf32>, vector<2x10xf32> -> vector<2x10xf32>
    %c0_24 = arith.constant 0 : index
    %c0_25 = arith.constant 0 : index
    %43 = vector.load %arg7[%c0_24, %c0_25] : memref<1x10xf32, #tpu.memory_space<vmem>>, vector<1x10xf32>
    %44 = vector.broadcast %43 : vector<1x10xf32> to vector<2x10xf32>
    %45 = arith.addf %42, %44 : vector<2x10xf32>
    %c0_26 = arith.constant 0 : index
    %c0_27 = arith.constant 0 : index
    %46 = vector.load %arg8[%c0_26, %c0_27] : memref<2x10xf32, #tpu.memory_space<vmem>>, vector<2x10xf32>
    tpu.vector_store %arg8[%c0_26, %c0_27], %45 {strides = array<i32>} : memref<2x10xf32, #tpu.memory_space<vmem>>, vector<2x10xf32>,
    return
  }
}

</mosaic_0001>

<llo_original>
// kernel: forward.1
$region0: #{forward.1}
  #allocation0 [shape = 'u32[]', space=smem, size = 0x4, offset = 0x4, fixed_abs, tag = 'smem constant byte address 0x4 - core index']
  #allocation1 [shape = 'u32[72,128]{1,0:T(1,128)}', space=vmem, size = 0x9000, scoped, tag = 'internal scratch']
  %s0 = inlined_call_operand.vmem [shape: f32[27,2048], index: 0, kind: input, shape index: {}]
  %s1 = inlined_call_operand.vmem [shape: f32[16,27], index: 1, kind: input, shape index: {}]
  %s2 = inlined_call_operand.vmem [shape: f32[16,1], index: 2, kind: input, shape index: {}]
  %s3 = inlined_call_operand.vmem [shape: f32[16,1], index: 3, kind: input, shape index: {}]
  %s4 = inlined_call_operand.vmem [shape: f32[1024,160], index: 4, kind: input, shape index: {}]
  %s5 = inlined_call_operand.vmem [shape: f32[16,160], index: 5, kind: input, shape index: {}]
  %s6 = inlined_call_operand.vmem [shape: f32[160,10], index: 6, kind: input, shape index: {}]
  %s7 = inlined_call_operand.vmem [shape: f32[1,10], index: 7, kind: input, shape index: {}]
  %s8 = inlined_call_operand.hbm [shape: f32[2,10], index: 8, kind: output, shape index: {}]
  %s9 = sld [smem:[#allocation0]]
  $region42: #{forward.1} parent=0
    _
  %s11 = ssub.s32 1, %s9
  %s12 = scalar_select 0, %s11, %s9
  $region1: #{forward.1} parent=0
    #allocation2 [shape = 'u8[1024]{0}', space=vmem, size = 0x400, scoped, tag = 'output window, operand 0, single buffered']
    #allocation3 [shape = 's32[1]{0}', space=sflag, size = 0x4, scoped, tag = 'scoped memory for forward.1']
    %13 = vsyncpa [#allocation3], 0
    // Predicated region
    $region2: #{forward.1} parent=1 // pred_check
      _
    $region3: #{forward.1} parent=1 // pred_check_branch
      %15 = sbr.rel (0) target = $region5
    $region4: #{forward.1} parent=1 // pred_region
      _
    $region5: #{forward.1} parent=1 // pred_fallthru
      _
    // Predicated region
    $region6: #{forward.1} parent=1 // pred_check
      _
    $region7: #{forward.1} parent=1 // pred_check_branch
      %17 = sbr.rel (0) target = $region9
    $region8: #{forward.1} parent=1 // pred_region
      _
    $region9: #{forward.1} parent=1 // pred_fallthru
      _
    // Predicated region
    $region10: #{forward.1} parent=1 // pred_check
      _
    $region11: #{forward.1} parent=1 // pred_check_branch
      %19 = sbr.rel (0) target = $region13
    $region12: #{forward.1} parent=1 // pred_region
      _
    $region13: #{forward.1} parent=1 // pred_fallthru
      _
    // Predicated region
    $region14: #{forward.1} parent=1 // pred_check
      _
    $region15: #{forward.1} parent=1 // pred_check_branch
      %21 = sbr.rel (0) target = $region17
    $region16: #{forward.1} parent=1 // pred_region
      _
    $region17: #{forward.1} parent=1 // pred_fallthru
      _
    // Predicated region
    $region18: #{forward.1} parent=1 // pred_check
      _
    $region19: #{forward.1} parent=1 // pred_check_branch
      %23 = sbr.rel (0) target = $region21
    $region20: #{forward.1} parent=1 // pred_region
      _
    $region21: #{forward.1} parent=1 // pred_fallthru
      _
    // Predicated region
    $region22: #{forward.1} parent=1 // pred_check
      _
    $region23: #{forward.1} parent=1 // pred_check_branch
      %25 = sbr.rel (0) target = $region25
    $region24: #{forward.1} parent=1 // pred_region
      _
    $region25: #{forward.1} parent=1 // pred_fallthru
      _
    // Predicated region
    $region26: #{forward.1} parent=1 // pred_check
      _
    $region27: #{forward.1} parent=1 // pred_check_branch
      %27 = sbr.rel (0) target = $region29
    $region28: #{forward.1} parent=1 // pred_region
      _
    $region29: #{forward.1} parent=1 // pred_fallthru
      _
    // Predicated region
    $region30: #{forward.1} parent=1 // pred_check
      _
    $region31: #{forward.1} parent=1 // pred_check_branch
      %29 = sbr.rel (0) target = $region33
    $region32: #{forward.1} parent=1 // pred_region
      _
    $region33: #{forward.1} parent=1 // pred_fallthru
      _
    %v30 = vld [vmem:[%s1] sm:$0xff]
    %v31 = vld [vmem:[%s1 + $0x8] sm:$0xff]
    %v32 = vld [vmem:[%s0] sm:$0xff]
    %v33 = vld [vmem:[%s0 + $0x8] sm:$0xff]
    %v34 = vld [vmem:[%s0 + $0x10] sm:$0xff]
    %v35 = vld [vmem:[%s0 + $0x18] sm:$0xff]
    %v36 = vld [vmem:[%s0 + $0x20] sm:$0xff]
    %v37 = vld [vmem:[%s0 + $0x28] sm:$0xff]
    %v38 = vld [vmem:[%s0 + $0x30] sm:$0xff]
    %v39 = vld [vmem:[%s0 + $0x38] sm:$0xff]
    %v40 = vld [vmem:[%s0 + $0x40] sm:$0xff]
    %v41 = vld [vmem:[%s0 + $0x48] sm:$0xff]
    %v42 = vld [vmem:[%s0 + $0x50] sm:$0xff]
    %v43 = vld [vmem:[%s0 + $0x58] sm:$0xff]
    %v44 = vld [vmem:[%s0 + $0x60] sm:$0xff]
    %v45 = vld [vmem:[%s0 + $0x68] sm:$0xff]
    %v46 = vld [vmem:[%s0 + $0x70] sm:$0xff]
    %v47 = vld [vmem:[%s0 + $0x78] sm:$0xff]
    %v48 = vld [vmem:[%s0 + $0x80] sm:$0xff]
    %v49 = vld [vmem:[%s0 + $0x88] sm:$0xff]
    %v50 = vld [vmem:[%s0 + $0x90] sm:$0xff]
    %v51 = vld [vmem:[%s0 + $0x98] sm:$0xff]
    %v52 = vld [vmem:[%s0 + $0xa0] sm:$0xff]
    %v53 = vld [vmem:[%s0 + $0xa8] sm:$0xff]
    %v54 = vld [vmem:[%s0 + $0xb0] sm:$0xff]
    %v55 = vld [vmem:[%s0 + $0xb8] sm:$0xff]
    %v56 = vld [vmem:[%s0 + $0xc0] sm:$0xff]
    %v57 = vld [vmem:[%s0 + $0xc8] sm:$0xff]
    %v58 = vld [vmem:[%s0 + $0xd0] sm:$0xff]
    %v59 = vld [vmem:[%s0 + $0xd8] sm:$0xff]
    %v60 = vld [vmem:[%s0 + $0xe0] sm:$0xff]
    %v61 = vld [vmem:[%s0 + $0xe8] sm:$0xff]
    %v62 = vld [vmem:[%s0 + $0xf0] sm:$0xff]
    %v63 = vld [vmem:[%s0 + $0xf8] sm:$0xff]
    %v64 = vld [vmem:[%s0 + $0x100] sm:$0xff]
    %v65 = vld [vmem:[%s0 + $0x108] sm:$0xff]
    %v66 = vld [vmem:[%s0 + $0x110] sm:$0xff]
    %v67 = vld [vmem:[%s0 + $0x118] sm:$0xff]
    %v68 = vld [vmem:[%s0 + $0x120] sm:$0xff]
    %v69 = vld [vmem:[%s0 + $0x128] sm:$0xff]
    %v70 = vld [vmem:[%s0 + $0x130] sm:$0xff]
    %v71 = vld [vmem:[%s0 + $0x138] sm:$0xff]
    %v72 = vld [vmem:[%s0 + $0x140] sm:$0xff]
    %v73 = vld [vmem:[%s0 + $0x148] sm:$0xff]
    %v74 = vld [vmem:[%s0 + $0x150] sm:$0xff]
    %v75 = vld [vmem:[%s0 + $0x158] sm:$0xff]
    %v76 = vld [vmem:[%s0 + $0x160] sm:$0xff]
    %v77 = vld [vmem:[%s0 + $0x168] sm:$0xff]
    %v78 = vld [vmem:[%s0 + $0x170] sm:$0xff]
    %v79 = vld [vmem:[%s0 + $0x178] sm:$0xff]
    %v80 = vld [vmem:[%s0 + $0x180] sm:$0x7]
    %v81 = vld [vmem:[%s0 + $0x188] sm:$0x7]
    %v82 = vld [vmem:[%s0 + $0x190] sm:$0x7]
    %v83 = vld [vmem:[%s0 + $0x198] sm:$0x7]
    %v84 = vld [vmem:[%s0 + $0x1a0] sm:$0x7]
    %v85 = vld [vmem:[%s0 + $0x1a8] sm:$0x7]
    %v86 = vld [vmem:[%s0 + $0x1b0] sm:$0x7]
    %v87 = vld [vmem:[%s0 + $0x1b8] sm:$0x7]
    %v88 = vld [vmem:[%s0 + $0x1c0] sm:$0x7]
    %v89 = vld [vmem:[%s0 + $0x1c8] sm:$0x7]
    %v90 = vld [vmem:[%s0 + $0x1d0] sm:$0x7]
    %v91 = vld [vmem:[%s0 + $0x1d8] sm:$0x7]
    %v92 = vld [vmem:[%s0 + $0x1e0] sm:$0x7]
    %v93 = vld [vmem:[%s0 + $0x1e8] sm:$0x7]
    %v94 = vld [vmem:[%s0 + $0x1f0] sm:$0x7]
    %v95 = vld [vmem:[%s0 + $0x1f8] sm:$0x7]
    %vm96 = vcmask 220160
    %v98 = vsel %vm96, %v30, 0
    %v101 = vsel %vm96, %v31, 0
    %vm103 = vcmask 1042432
    %v105 = vsel %vm103, %v80, 0
    %v108 = vsel %vm103, %v81, 0
    %v111 = vsel %vm103, %v82, 0
    %v114 = vsel %vm103, %v83, 0
    %v117 = vsel %vm103, %v84, 0
    %v120 = vsel %vm103, %v85, 0
    %v123 = vsel %vm103, %v86, 0
    %v126 = vsel %vm103, %v87, 0
    %v129 = vsel %vm103, %v88, 0
    %v132 = vsel %vm103, %v89, 0
    %v135 = vsel %vm103, %v90, 0
    %v138 = vsel %vm103, %v91, 0
    %v141 = vsel %vm103, %v92, 0
    %v144 = vsel %vm103, %v93, 0
    %v147 = vsel %vm103, %v94, 0
    %v150 = vsel %vm103, %v95, 0
    %152 = vmatpush.msra.mxu0 0.0
    %153 = vmatpush.msra.mxu0 0.0
    %154 = vmatpush.msra.mxu0 0.0
    %155 = vmatpush.msra.mxu0 0.0
    %156 = vmatpush.msra.mxu0 0.0
    %157 = vmatpush.msra.mxu0 0.0
    %158 = vmatpush.msra.mxu0 0.0
    %159 = vmatpush.msra.mxu0 0.0
    %160 = vmatpush.msra.mxu0 0.0
    %161 = vmatpush.msra.mxu0 0.0
    %162 = vmatpush.msra.mxu0 0.0
    %163 = vmatpush.msra.mxu0 0.0
    %164 = vmatpush.msra.mxu0 %v105
    %165 = vmatpush.msra.mxu0 %v64
    %166 = vmatpush.msra.mxu0 %v48
    %167 = vmatpush.msra.mxu0 %v32
    %168 = vmatmul.f32.gmra.mxu0 %v98
    %v169 = vpop.f32.mrf.mxu0
    %v170 = vadd.f32 0.0, %v169
    %171 = vmatmul.f32.gmra.mxu0 %v101
    %v172 = vpop.f32.mrf.mxu0
    %v173 = vadd.f32 0.0, %v172
    %174 = vdwg.mxu0
    %175 = vmatpush.msra.mxu0 0.0
    %176 = vmatpush.msra.mxu0 0.0
    %177 = vmatpush.msra.mxu0 0.0
    %178 = vmatpush.msra.mxu0 0.0
    %179 = vmatpush.msra.mxu0 0.0
    %180 = vmatpush.msra.mxu0 0.0
    %181 = vmatpush.msra.mxu0 0.0
    %182 = vmatpush.msra.mxu0 0.0
    %183 = vmatpush.msra.mxu0 0.0
    %184 = vmatpush.msra.mxu0 0.0
    %185 = vmatpush.msra.mxu0 0.0
    %186 = vmatpush.msra.mxu0 0.0
    %187 = vmatpush.msra.mxu0 %v108
    %188 = vmatpush.msra.mxu0 %v65
    %189 = vmatpush.msra.mxu0 %v49
    %190 = vmatpush.msra.mxu0 %v33
    %191 = vmatmul.f32.gmra.mxu0 %v98
    %v192 = vpop.f32.mrf.mxu0
    %v193 = vadd.f32 0.0, %v192
    %194 = vmatmul.f32.gmra.mxu0 %v101
    %v195 = vpop.f32.mrf.mxu0
    %v196 = vadd.f32 0.0, %v195
    %197 = vdwg.mxu0
    %198 = vmatpush.msra.mxu0 0.0
    %199 = vmatpush.msra.mxu0 0.0
    %200 = vmatpush.msra.mxu0 0.0
    %201 = vmatpush.msra.mxu0 0.0
    %202 = vmatpush.msra.mxu0 0.0
    %203 = vmatpush.msra.mxu0 0.0
    %204 = vmatpush.msra.mxu0 0.0
    %205 = vmatpush.msra.mxu0 0.0
    %206 = vmatpush.msra.mxu0 0.0
    %207 = vmatpush.msra.mxu0 0.0
    %208 = vmatpush.msra.mxu0 0.0
    %209 = vmatpush.msra.mxu0 0.0
    %210 = vmatpush.msra.mxu0 %v111
    %211 = vmatpush.msra.mxu0 %v66
    %212 = vmatpush.msra.mxu0 %v50
    %213 = vmatpush.msra.mxu0 %v34
    %214 = vmatmul.f32.gmra.mxu0 %v98
    %v215 = vpop.f32.mrf.mxu0
    %v216 = vadd.f32 0.0, %v215
    %217 = vmatmul.f32.gmra.mxu0 %v101
    %v218 = vpop.f32.mrf.mxu0
    %v219 = vadd.f32 0.0, %v218
    %220 = vdwg.mxu0
    %221 = vmatpush.msra.mxu0 0.0
    %222 = vmatpush.msra.mxu0 0.0
    %223 = vmatpush.msra.mxu0 0.0
    %224 = vmatpush.msra.mxu0 0.0
    %225 = vmatpush.msra.mxu0 0.0
    %226 = vmatpush.msra.mxu0 0.0
    %227 = vmatpush.msra.mxu0 0.0
    %228 = vmatpush.msra.mxu0 0.0
    %229 = vmatpush.msra.mxu0 0.0
    %230 = vmatpush.msra.mxu0 0.0
    %231 = vmatpush.msra.mxu0 0.0
    %232 = vmatpush.msra.mxu0 0.0
    %233 = vmatpush.msra.mxu0 %v114
    %234 = vmatpush.msra.mxu0 %v67
    %235 = vmatpush.msra.mxu0 %v51
    %236 = vmatpush.msra.mxu0 %v35
    %237 = vmatmul.f32.gmra.mxu0 %v98
    %v238 = vpop.f32.mrf.mxu0
    %v239 = vadd.f32 0.0, %v238
    %240 = vmatmul.f32.gmra.mxu0 %v101
    %v241 = vpop.f32.mrf.mxu0
    %v242 = vadd.f32 0.0, %v241
    %243 = vdwg.mxu0
    %244 = vmatpush.msra.mxu0 0.0
    %245 = vmatpush.msra.mxu0 0.0
    %246 = vmatpush.msra.mxu0 0.0
    %247 = vmatpush.msra.mxu0 0.0
    %248 = vmatpush.msra.mxu0 0.0
    %249 = vmatpush.msra.mxu0 0.0
    %250 = vmatpush.msra.mxu0 0.0
    %251 = vmatpush.msra.mxu0 0.0
    %252 = vmatpush.msra.mxu0 0.0
    %253 = vmatpush.msra.mxu0 0.0
    %254 = vmatpush.msra.mxu0 0.0
    %255 = vmatpush.msra.mxu0 0.0
    %256 = vmatpush.msra.mxu0 %v117
    %257 = vmatpush.msra.mxu0 %v68
    %258 = vmatpush.msra.mxu0 %v52
    %259 = vmatpush.msra.mxu0 %v36
    %260 = vmatmul.f32.gmra.mxu0 %v98
    %v261 = vpop.f32.mrf.mxu0
    %v262 = vadd.f32 0.0, %v261
    %263 = vmatmul.f32.gmra.mxu0 %v101
    %v264 = vpop.f32.mrf.mxu0
    %v265 = vadd.f32 0.0, %v264
    %266 = vdwg.mxu0
    %267 = vmatpush.msra.mxu0 0.0
    %268 = vmatpush.msra.mxu0 0.0
    %269 = vmatpush.msra.mxu0 0.0
    %270 = vmatpush.msra.mxu0 0.0
    %271 = vmatpush.msra.mxu0 0.0
    %272 = vmatpush.msra.mxu0 0.0
    %273 = vmatpush.msra.mxu0 0.0
    %274 = vmatpush.msra.mxu0 0.0
    %275 = vmatpush.msra.mxu0 0.0
    %276 = vmatpush.msra.mxu0 0.0
    %277 = vmatpush.msra.mxu0 0.0
    %278 = vmatpush.msra.mxu0 0.0
    %279 = vmatpush.msra.mxu0 %v120
    %280 = vmatpush.msra.mxu0 %v69
    %281 = vmatpush.msra.mxu0 %v53
    %282 = vmatpush.msra.mxu0 %v37
    %283 = vmatmul.f32.gmra.mxu0 %v98
    %v284 = vpop.f32.mrf.mxu0
    %v285 = vadd.f32 0.0, %v284
    %286 = vmatmul.f32.gmra.mxu0 %v101
    %v287 = vpop.f32.mrf.mxu0
    %v288 = vadd.f32 0.0, %v287
    %289 = vdwg.mxu0
    %290 = vmatpush.msra.mxu0 0.0
    %291 = vmatpush.msra.mxu0 0.0
    %292 = vmatpush.msra.mxu0 0.0
    %293 = vmatpush.msra.mxu0 0.0
    %294 = vmatpush.msra.mxu0 0.0
    %295 = vmatpush.msra.mxu0 0.0
    %296 = vmatpush.msra.mxu0 0.0
    %297 = vmatpush.msra.mxu0 0.0
    %298 = vmatpush.msra.mxu0 0.0
    %299 = vmatpush.msra.mxu0 0.0
    %300 = vmatpush.msra.mxu0 0.0
    %301 = vmatpush.msra.mxu0 0.0
    %302 = vmatpush.msra.mxu0 %v123
    %303 = vmatpush.msra.mxu0 %v70
    %304 = vmatpush.msra.mxu0 %v54
    %305 = vmatpush.msra.mxu0 %v38
    %306 = vmatmul.f32.gmra.mxu0 %v98
    %v307 = vpop.f32.mrf.mxu0
    %v308 = vadd.f32 0.0, %v307
    %309 = vmatmul.f32.gmra.mxu0 %v101
    %v310 = vpop.f32.mrf.mxu0
    %v311 = vadd.f32 0.0, %v310
    %312 = vdwg.mxu0
    %313 = vmatpush.msra.mxu0 0.0
    %314 = vmatpush.msra.mxu0 0.0
    %315 = vmatpush.msra.mxu0 0.0
    %316 = vmatpush.msra.mxu0 0.0
    %317 = vmatpush.msra.mxu0 0.0
    %318 = vmatpush.msra.mxu0 0.0
    %319 = vmatpush.msra.mxu0 0.0
    %320 = vmatpush.msra.mxu0 0.0
    %321 = vmatpush.msra.mxu0 0.0
    %322 = vmatpush.msra.mxu0 0.0
    %323 = vmatpush.msra.mxu0 0.0
    %324 = vmatpush.msra.mxu0 0.0
    %325 = vmatpush.msra.mxu0 %v126
    %326 = vmatpush.msra.mxu0 %v71
    %327 = vmatpush.msra.mxu0 %v55
    %328 = vmatpush.msra.mxu0 %v39
    %329 = vmatmul.f32.gmra.mxu0 %v98
    %v330 = vpop.f32.mrf.mxu0
    %v331 = vadd.f32 0.0, %v330
    %332 = vmatmul.f32.gmra.mxu0 %v101
    %v333 = vpop.f32.mrf.mxu0
    %v334 = vadd.f32 0.0, %v333
    %335 = vdwg.mxu0
    %336 = vmatpush.msra.mxu0 0.0
    %337 = vmatpush.msra.mxu0 0.0
    %338 = vmatpush.msra.mxu0 0.0
    %339 = vmatpush.msra.mxu0 0.0
    %340 = vmatpush.msra.mxu0 0.0
    %341 = vmatpush.msra.mxu0 0.0
    %342 = vmatpush.msra.mxu0 0.0
    %343 = vmatpush.msra.mxu0 0.0
    %344 = vmatpush.msra.mxu0 0.0
    %345 = vmatpush.msra.mxu0 0.0
    %346 = vmatpush.msra.mxu0 0.0
    %347 = vmatpush.msra.mxu0 0.0
    %348 = vmatpush.msra.mxu0 %v129
    %349 = vmatpush.msra.mxu0 %v72
    %350 = vmatpush.msra.mxu0 %v56
    %351 = vmatpush.msra.mxu0 %v40
    %352 = vmatmul.f32.gmra.mxu0 %v98
    %v353 = vpop.f32.mrf.mxu0
    %v354 = vadd.f32 0.0, %v353
    %355 = vmatmul.f32.gmra.mxu0 %v101
    %v356 = vpop.f32.mrf.mxu0
    %v357 = vadd.f32 0.0, %v356
    %358 = vdwg.mxu0
    %359 = vmatpush.msra.mxu0 0.0
    %360 = vmatpush.msra.mxu0 0.0
    %361 = vmatpush.msra.mxu0 0.0
    %362 = vmatpush.msra.mxu0 0.0
    %363 = vmatpush.msra.mxu0 0.0
    %364 = vmatpush.msra.mxu0 0.0
    %365 = vmatpush.msra.mxu0 0.0
    %366 = vmatpush.msra.mxu0 0.0
    %367 = vmatpush.msra.mxu0 0.0
    %368 = vmatpush.msra.mxu0 0.0
    %369 = vmatpush.msra.mxu0 0.0
    %370 = vmatpush.msra.mxu0 0.0
    %371 = vmatpush.msra.mxu0 %v132
    %372 = vmatpush.msra.mxu0 %v73
    %373 = vmatpush.msra.mxu0 %v57
    %374 = vmatpush.msra.mxu0 %v41
    %375 = vmatmul.f32.gmra.mxu0 %v98
    %v376 = vpop.f32.mrf.mxu0
    %v377 = vadd.f32 0.0, %v376
    %378 = vmatmul.f32.gmra.mxu0 %v101
    %v379 = vpop.f32.mrf.mxu0
    %v380 = vadd.f32 0.0, %v379
    %381 = vdwg.mxu0
    %382 = vmatpush.msra.mxu0 0.0
    %383 = vmatpush.msra.mxu0 0.0
    %384 = vmatpush.msra.mxu0 0.0
    %385 = vmatpush.msra.mxu0 0.0
    %386 = vmatpush.msra.mxu0 0.0
    %387 = vmatpush.msra.mxu0 0.0
    %388 = vmatpush.msra.mxu0 0.0
    %389 = vmatpush.msra.mxu0 0.0
    %390 = vmatpush.msra.mxu0 0.0
    %391 = vmatpush.msra.mxu0 0.0
    %392 = vmatpush.msra.mxu0 0.0
    %393 = vmatpush.msra.mxu0 0.0
    %394 = vmatpush.msra.mxu0 %v135
    %395 = vmatpush.msra.mxu0 %v74
    %396 = vmatpush.msra.mxu0 %v58
    %397 = vmatpush.msra.mxu0 %v42
    %398 = vmatmul.f32.gmra.mxu0 %v98
    %v399 = vpop.f32.mrf.mxu0
    %v400 = vadd.f32 0.0, %v399
    %401 = vmatmul.f32.gmra.mxu0 %v101
    %v402 = vpop.f32.mrf.mxu0
    %v403 = vadd.f32 0.0, %v402
    %404 = vdwg.mxu0
    %405 = vmatpush.msra.mxu0 0.0
    %406 = vmatpush.msra.mxu0 0.0
    %407 = vmatpush.msra.mxu0 0.0
    %408 = vmatpush.msra.mxu0 0.0
    %409 = vmatpush.msra.mxu0 0.0
    %410 = vmatpush.msra.mxu0 0.0
    %411 = vmatpush.msra.mxu0 0.0
    %412 = vmatpush.msra.mxu0 0.0
    %413 = vmatpush.msra.mxu0 0.0
    %414 = vmatpush.msra.mxu0 0.0
    %415 = vmatpush.msra.mxu0 0.0
    %416 = vmatpush.msra.mxu0 0.0
    %417 = vmatpush.msra.mxu0 %v138
    %418 = vmatpush.msra.mxu0 %v75
    %419 = vmatpush.msra.mxu0 %v59
    %420 = vmatpush.msra.mxu0 %v43
    %421 = vmatmul.f32.gmra.mxu0 %v98
    %v422 = vpop.f32.mrf.mxu0
    %v423 = vadd.f32 0.0, %v422
    %424 = vmatmul.f32.gmra.mxu0 %v101
    %v425 = vpop.f32.mrf.mxu0
    %v426 = vadd.f32 0.0, %v425
    %427 = vdwg.mxu0
    %428 = vmatpush.msra.mxu0 0.0
    %429 = vmatpush.msra.mxu0 0.0
    %430 = vmatpush.msra.mxu0 0.0
    %431 = vmatpush.msra.mxu0 0.0
    %432 = vmatpush.msra.mxu0 0.0
    %433 = vmatpush.msra.mxu0 0.0
    %434 = vmatpush.msra.mxu0 0.0
    %435 = vmatpush.msra.mxu0 0.0
    %436 = vmatpush.msra.mxu0 0.0
    %437 = vmatpush.msra.mxu0 0.0
    %438 = vmatpush.msra.mxu0 0.0
    %439 = vmatpush.msra.mxu0 0.0
    %440 = vmatpush.msra.mxu0 %v141
    %441 = vmatpush.msra.mxu0 %v76
    %442 = vmatpush.msra.mxu0 %v60
    %443 = vmatpush.msra.mxu0 %v44
    %444 = vmatmul.f32.gmra.mxu0 %v98
    %v445 = vpop.f32.mrf.mxu0
    %v446 = vadd.f32 0.0, %v445
    %447 = vmatmul.f32.gmra.mxu0 %v101
    %v448 = vpop.f32.mrf.mxu0
    %v449 = vadd.f32 0.0, %v448
    %450 = vdwg.mxu0
    %451 = vmatpush.msra.mxu0 0.0
    %452 = vmatpush.msra.mxu0 0.0
    %453 = vmatpush.msra.mxu0 0.0
    %454 = vmatpush.msra.mxu0 0.0
    %455 = vmatpush.msra.mxu0 0.0
    %456 = vmatpush.msra.mxu0 0.0
    %457 = vmatpush.msra.mxu0 0.0
    %458 = vmatpush.msra.mxu0 0.0
    %459 = vmatpush.msra.mxu0 0.0
    %460 = vmatpush.msra.mxu0 0.0
    %461 = vmatpush.msra.mxu0 0.0
    %462 = vmatpush.msra.mxu0 0.0
    %463 = vmatpush.msra.mxu0 %v144
    %464 = vmatpush.msra.mxu0 %v77
    %465 = vmatpush.msra.mxu0 %v61
    %466 = vmatpush.msra.mxu0 %v45
    %467 = vmatmul.f32.gmra.mxu0 %v98
    %v468 = vpop.f32.mrf.mxu0
    %v469 = vadd.f32 0.0, %v468
    %470 = vmatmul.f32.gmra.mxu0 %v101
    %v471 = vpop.f32.mrf.mxu0
    %v472 = vadd.f32 0.0, %v471
    %473 = vdwg.mxu0
    %474 = vmatpush.msra.mxu0 0.0
    %475 = vmatpush.msra.mxu0 0.0
    %476 = vmatpush.msra.mxu0 0.0
    %477 = vmatpush.msra.mxu0 0.0
    %478 = vmatpush.msra.mxu0 0.0
    %479 = vmatpush.msra.mxu0 0.0
    %480 = vmatpush.msra.mxu0 0.0
    %481 = vmatpush.msra.mxu0 0.0
    %482 = vmatpush.msra.mxu0 0.0
    %483 = vmatpush.msra.mxu0 0.0
    %484 = vmatpush.msra.mxu0 0.0
    %485 = vmatpush.msra.mxu0 0.0
    %486 = vmatpush.msra.mxu0 %v147
    %487 = vmatpush.msra.mxu0 %v78
    %488 = vmatpush.msra.mxu0 %v62
    %489 = vmatpush.msra.mxu0 %v46
    %490 = vmatmul.f32.gmra.mxu0 %v98
    %v491 = vpop.f32.mrf.mxu0
    %v492 = vadd.f32 0.0, %v491
    %493 = vmatmul.f32.gmra.mxu0 %v101
    %v494 = vpop.f32.mrf.mxu0
    %v495 = vadd.f32 0.0, %v494
    %496 = vdwg.mxu0
    %497 = vmatpush.msra.mxu0 0.0
    %498 = vmatpush.msra.mxu0 0.0
    %499 = vmatpush.msra.mxu0 0.0
    %500 = vmatpush.msra.mxu0 0.0
    %501 = vmatpush.msra.mxu0 0.0
    %502 = vmatpush.msra.mxu0 0.0
    %503 = vmatpush.msra.mxu0 0.0
    %504 = vmatpush.msra.mxu0 0.0
    %505 = vmatpush.msra.mxu0 0.0
    %506 = vmatpush.msra.mxu0 0.0
    %507 = vmatpush.msra.mxu0 0.0
    %508 = vmatpush.msra.mxu0 0.0
    %509 = vmatpush.msra.mxu0 %v150
    %510 = vmatpush.msra.mxu0 %v79
    %511 = vmatpush.msra.mxu0 %v63
    %512 = vmatpush.msra.mxu0 %v47
    %513 = vmatmul.f32.gmra.mxu0 %v98
    %v514 = vpop.f32.mrf.mxu0
    %v515 = vadd.f32 0.0, %v514
    %516 = vmatmul.f32.gmra.mxu0 %v101
    %v517 = vpop.f32.mrf.mxu0
    %v518 = vadd.f32 0.0, %v517
    %519 = vdwg.mxu0
    %v520 = vadd.f32 %v170, %v193
    %v521 = vadd.f32 %v520, %v216
    %v522 = vadd.f32 %v521, %v239
    %v523 = vadd.f32 %v522, %v262
    %v524 = vadd.f32 %v523, %v285
    %v525 = vadd.f32 %v524, %v308
    %v526 = vadd.f32 %v525, %v331
    %v527 = vadd.f32 %v526, %v354
    %v528 = vadd.f32 %v527, %v377
    %v529 = vadd.f32 %v528, %v400
    %v530 = vadd.f32 %v529, %v423
    %v531 = vadd.f32 %v530, %v446
    %v532 = vadd.f32 %v531, %v469
    %v533 = vadd.f32 %v532, %v492
    %v534 = vadd.f32 %v533, %v515
    %535 = vadd.xlane.f32.xlu0 %v534
    %v536 = vpop.xlane.xlu0 %535
    %v537 = vadd.f32 %v173, %v196
    %v538 = vadd.f32 %v537, %v219
    %v539 = vadd.f32 %v538, %v242
    %v540 = vadd.f32 %v539, %v265
    %v541 = vadd.f32 %v540, %v288
    %v542 = vadd.f32 %v541, %v311
    %v543 = vadd.f32 %v542, %v334
    %v544 = vadd.f32 %v543, %v357
    %v545 = vadd.f32 %v544, %v380
    %v546 = vadd.f32 %v545, %v403
    %v547 = vadd.f32 %v546, %v426
    %v548 = vadd.f32 %v547, %v449
    %v549 = vadd.f32 %v548, %v472
    %v550 = vadd.f32 %v549, %v495
    %v551 = vadd.f32 %v550, %v518
    %552 = vadd.xlane.f32.xlu0 %v551
    %v553 = vpop.xlane.xlu0 %552
    %v554 = vmul.f32 %v170, %v170
    %v555 = vmul.f32 %v193, %v193
    %v556 = vmul.f32 %v216, %v216
    %v557 = vmul.f32 %v239, %v239
    %v558 = vmul.f32 %v262, %v262
    %v559 = vmul.f32 %v285, %v285
    %v560 = vmul.f32 %v308, %v308
    %v561 = vmul.f32 %v331, %v331
    %v562 = vmul.f32 %v354, %v354
    %v563 = vmul.f32 %v377, %v377
    %v564 = vmul.f32 %v400, %v400
    %v565 = vmul.f32 %v423, %v423
    %v566 = vmul.f32 %v446, %v446
    %v567 = vmul.f32 %v469, %v469
    %v568 = vmul.f32 %v492, %v492
    %v569 = vmul.f32 %v515, %v515
    %v570 = vmul.f32 %v173, %v173
    %v571 = vmul.f32 %v196, %v196
    %v572 = vmul.f32 %v219, %v219
    %v573 = vmul.f32 %v242, %v242
    %v574 = vmul.f32 %v265, %v265
    %v575 = vmul.f32 %v288, %v288
    %v576 = vmul.f32 %v311, %v311
    %v577 = vmul.f32 %v334, %v334
    %v578 = vmul.f32 %v357, %v357
    %v579 = vmul.f32 %v380, %v380
    %v580 = vmul.f32 %v403, %v403
    %v581 = vmul.f32 %v426, %v426
    %v582 = vmul.f32 %v449, %v449
    %v583 = vmul.f32 %v472, %v472
    %v584 = vmul.f32 %v495, %v495
    %v585 = vmul.f32 %v518, %v518
    %v586 = vadd.f32 %v554, %v555
    %v587 = vadd.f32 %v586, %v556
    %v588 = vadd.f32 %v587, %v557
    %v589 = vadd.f32 %v588, %v558
    %v590 = vadd.f32 %v589, %v559
    %v591 = vadd.f32 %v590, %v560
    %v592 = vadd.f32 %v591, %v561
    %v593 = vadd.f32 %v592, %v562
    %v594 = vadd.f32 %v593, %v563
    %v595 = vadd.f32 %v594, %v564
    %v596 = vadd.f32 %v595, %v565
    %v597 = vadd.f32 %v596, %v566
    %v598 = vadd.f32 %v597, %v567
    %v599 = vadd.f32 %v598, %v568
    %v600 = vadd.f32 %v599, %v569
    %601 = vadd.xlane.f32.xlu0 %v600
    %v602 = vpop.xlane.xlu0 %601
    %v603 = vadd.f32 %v570, %v571
    %v604 = vadd.f32 %v603, %v572
    %v605 = vadd.f32 %v604, %v573
    %v606 = vadd.f32 %v605, %v574
    %v607 = vadd.f32 %v606, %v575
    %v608 = vadd.f32 %v607, %v576
    %v609 = vadd.f32 %v608, %v577
    %v610 = vadd.f32 %v609, %v578
    %v611 = vadd.f32 %v610, %v579
    %v612 = vadd.f32 %v611, %v580
    %v613 = vadd.f32 %v612, %v581
    %v614 = vadd.f32 %v613, %v582
    %v615 = vadd.f32 %v614, %v583
    %v616 = vadd.f32 %v615, %v584
    %v617 = vadd.f32 %v616, %v585
    %618 = vadd.xlane.f32.xlu0 %v617
    %v619 = vpop.xlane.xlu0 %618
    %v620 = vrcp.pop 2048.0
    %v621 = vmul.f32 2048.0, %v620
    %v622 = vsub.f32 1.0, %v621
    %v623 = vmul.f32 %v620, %v622
    %v624 = vadd.f32 %v620, %v623
    %vm625 = vweird.f32 %v620
    %v626 = vsel %vm625, %v620, %v624
    %v627 = vmul.f32 %v536, %v626
    %v628 = vmul.f32 %v553, %v626
    %v629 = vmul.f32 %v602, %v626
    %v630 = vmul.f32 %v619, %v626
    %v631 = vmul.f32 %v627, %v627
    %v632 = vmul.f32 %v628, %v628
    %v633 = vsub.f32 %v629, %v631
    %v634 = vsub.f32 %v630, %v632
    %v635 = vadd.f32 %v633, 1e-05
    %v636 = vadd.f32 %v634, 1e-05
    %v637 = vrsqrt.pop %v635
    %v638 = vmul.f32 %v637, %v635
    %v639 = vmul.f32 %v638, %v637
    %v640 = vmul.f32 0.5, %v639
    %v641 = vsub.f32 1.5, %v640
    %v642 = vmul.f32 %v637, %v641
    %vm643 = vweird.f32 %v635
    %vm644 = vweird.f32 %v637
    %vm645 = vmor %vm643, %vm644
    %v646 = vsel %vm645, %v637, %v642
    %v647 = vrsqrt.pop %v636
    %v648 = vmul.f32 %v647, %v636
    %v649 = vmul.f32 %v648, %v647
    %v650 = vmul.f32 0.5, %v649
    %v651 = vsub.f32 1.5, %v650
    %v652 = vmul.f32 %v647, %v651
    %vm653 = vweird.f32 %v636
    %vm654 = vweird.f32 %v647
    %vm655 = vmor %vm653, %vm654
    %v656 = vsel %vm655, %v647, %v652
    %v657 = vld [vmem:[%s2] sm:$0xff]
    %v658 = vld [vmem:[%s2 + $0x8] sm:$0xff]
    %v659 = vmul.f32 %v646, %v657
    %v660 = vmul.f32 %v656, %v658
    %v661 = vld [vmem:[%s3] sm:$0xff]
    %v662 = vld [vmem:[%s3 + $0x8] sm:$0xff]
    %v663 = vmul.f32 %v627, %v659
    %v664 = vmul.f32 %v628, %v660
    %v665 = vsub.f32 %v661, %v663
    %v666 = vsub.f32 %v662, %v664
    %668 = vset.pattern.permute.xlu0 0
    %669 = vperm.xlu0 %668, %v659
    %v670 = vpop.permute.xlu0 %669
    %673 = vset.pattern.permute.xlu0 0
    %674 = vperm.xlu0 %673, %v660
    %v675 = vpop.permute.xlu0 %674
    %v677 = vmul.f32 %v170, %v670
    %v678 = vmul.f32 %v193, %v670
    %v679 = vmul.f32 %v216, %v670
    %v680 = vmul.f32 %v239, %v670
    %v681 = vmul.f32 %v262, %v670
    %v682 = vmul.f32 %v285, %v670
    %v683 = vmul.f32 %v308, %v670
    %v684 = vmul.f32 %v331, %v670
    %v685 = vmul.f32 %v354, %v670
    %v686 = vmul.f32 %v377, %v670
    %v687 = vmul.f32 %v400, %v670
    %v688 = vmul.f32 %v423, %v670
    %v689 = vmul.f32 %v446, %v670
    %v690 = vmul.f32 %v469, %v670
    %v691 = vmul.f32 %v492, %v670
    %v692 = vmul.f32 %v515, %v670
    %v693 = vmul.f32 %v173, %v675
    %v694 = vmul.f32 %v196, %v675
    %v695 = vmul.f32 %v219, %v675
    %v696 = vmul.f32 %v242, %v675
    %v697 = vmul.f32 %v265, %v675
    %v698 = vmul.f32 %v288, %v675
    %v699 = vmul.f32 %v311, %v675
    %v700 = vmul.f32 %v334, %v675
    %v701 = vmul.f32 %v357, %v675
    %v702 = vmul.f32 %v380, %v675
    %v703 = vmul.f32 %v403, %v675
    %v704 = vmul.f32 %v426, %v675
    %v705 = vmul.f32 %v449, %v675
    %v706 = vmul.f32 %v472, %v675
    %v707 = vmul.f32 %v495, %v675
    %v708 = vmul.f32 %v518, %v675
    %710 = vset.pattern.permute.xlu0 0
    %711 = vperm.xlu0 %710, %v665
    %v712 = vpop.permute.xlu0 %711
    %715 = vset.pattern.permute.xlu0 0
    %716 = vperm.xlu0 %715, %v666
    %v717 = vpop.permute.xlu0 %716
    %v719 = vadd.f32 %v677, %v712
    %v720 = vadd.f32 %v678, %v712
    %v721 = vadd.f32 %v679, %v712
    %v722 = vadd.f32 %v680, %v712
    %v723 = vadd.f32 %v681, %v712
    %v724 = vadd.f32 %v682, %v712
    %v725 = vadd.f32 %v683, %v712
    %v726 = vadd.f32 %v684, %v712
    %v727 = vadd.f32 %v685, %v712
    %v728 = vadd.f32 %v686, %v712
    %v729 = vadd.f32 %v687, %v712
    %v730 = vadd.f32 %v688, %v712
    %v731 = vadd.f32 %v689, %v712
    %v732 = vadd.f32 %v690, %v712
    %v733 = vadd.f32 %v691, %v712
    %v734 = vadd.f32 %v692, %v712
    %v735 = vadd.f32 %v693, %v717
    %v736 = vadd.f32 %v694, %v717
    %v737 = vadd.f32 %v695, %v717
    %v738 = vadd.f32 %v696, %v717
    %v739 = vadd.f32 %v697, %v717
    %v740 = vadd.f32 %v698, %v717
    %v741 = vadd.f32 %v699, %v717
    %v742 = vadd.f32 %v700, %v717
    %v743 = vadd.f32 %v701, %v717
    %v744 = vadd.f32 %v702, %v717
    %v745 = vadd.f32 %v703, %v717
    %v746 = vadd.f32 %v704, %v717
    %v747 = vadd.f32 %v705, %v717
    %v748 = vadd.f32 %v706, %v717
    %v749 = vadd.f32 %v707, %v717
    %v750 = vadd.f32 %v708, %v717
    %v751 = vmax.f32 %v719, 0.0
    %v752 = vmax.f32 %v720, 0.0
    %v753 = vmax.f32 %v721, 0.0
    %v754 = vmax.f32 %v722, 0.0
    %v755 = vmax.f32 %v723, 0.0
    %v756 = vmax.f32 %v724, 0.0
    %v757 = vmax.f32 %v725, 0.0
    %v758 = vmax.f32 %v726, 0.0
    %v759 = vmax.f32 %v727, 0.0
    %v760 = vmax.f32 %v728, 0.0
    %v761 = vmax.f32 %v729, 0.0
    %v762 = vmax.f32 %v730, 0.0
    %v763 = vmax.f32 %v731, 0.0
    %v764 = vmax.f32 %v732, 0.0
    %v765 = vmax.f32 %v733, 0.0
    %v766 = vmax.f32 %v734, 0.0
    %v767 = vmax.f32 %v735, 0.0
    %v768 = vmax.f32 %v736, 0.0
    %v769 = vmax.f32 %v737, 0.0
    %v770 = vmax.f32 %v738, 0.0
    %v771 = vmax.f32 %v739, 0.0
    %v772 = vmax.f32 %v740, 0.0
    %v773 = vmax.f32 %v741, 0.0
    %v774 = vmax.f32 %v742, 0.0
    %v775 = vmax.f32 %v743, 0.0
    %v776 = vmax.f32 %v744, 0.0
    %v777 = vmax.f32 %v745, 0.0
    %v778 = vmax.f32 %v746, 0.0
    %v779 = vmax.f32 %v747, 0.0
    %v780 = vmax.f32 %v748, 0.0
    %v781 = vmax.f32 %v749, 0.0
    %v782 = vmax.f32 %v750, 0.0
    %v783 = vld [vmem:[%s4] sm:$0xff]
    %v784 = vld [vmem:[%s4 + $0x8] sm:$0xff]
    %v785 = vld [vmem:[%s4 + $0x10] sm:$0xff]
    %v786 = vld [vmem:[%s4 + $0x18] sm:$0xff]
    %v787 = vld [vmem:[%s4 + $0x20] sm:$0xff]
    %v788 = vld [vmem:[%s4 + $0x28] sm:$0xff]
    %v789 = vld [vmem:[%s4 + $0x30] sm:$0xff]
    %v790 = vld [vmem:[%s4 + $0x38] sm:$0xff]
    %v791 = vld [vmem:[%s4 + $0x40] sm:$0xff]
    %v792 = vld [vmem:[%s4 + $0x48] sm:$0xff]
    %v793 = vld [vmem:[%s4 + $0x50] sm:$0xff]
    %v794 = vld [vmem:[%s4 + $0x58] sm:$0xff]
    %v795 = vld [vmem:[%s4 + $0x60] sm:$0xff]
    %v796 = vld [vmem:[%s4 + $0x68] sm:$0xff]
    %v797 = vld [vmem:[%s4 + $0x70] sm:$0xff]
    %v798 = vld [vmem:[%s4 + $0x78] sm:$0xff]
    %v799 = vld [vmem:[%s4 + $0x80] sm:$0xff]
    %v800 = vld [vmem:[%s4 + $0x88] sm:$0xff]
    %v801 = vld [vmem:[%s4 + $0x90] sm:$0xff]
    %v802 = vld [vmem:[%s4 + $0x98] sm:$0xff]
    %v803 = vld [vmem:[%s4 + $0xa0] sm:$0xff]
    %v804 = vld [vmem:[%s4 + $0xa8] sm:$0xff]
    %v805 = vld [vmem:[%s4 + $0xb0] sm:$0xff]
    %v806 = vld [vmem:[%s4 + $0xb8] sm:$0xff]
    %v807 = vld [vmem:[%s4 + $0xc0] sm:$0xff]
    %v808 = vld [vmem:[%s4 + $0xc8] sm:$0xff]
    %v809 = vld [vmem:[%s4 + $0xd0] sm:$0xff]
    %v810 = vld [vmem:[%s4 + $0xd8] sm:$0xff]
    %v811 = vld [vmem:[%s4 + $0xe0] sm:$0xff]
    %v812 = vld [vmem:[%s4 + $0xe8] sm:$0xff]
    %v813 = vld [vmem:[%s4 + $0xf0] sm:$0xff]
    %v814 = vld [vmem:[%s4 + $0xf8] sm:$0xff]
    %v815 = vld [vmem:[%s4 + $0x100] sm:$0xff]
    %v816 = vld [vmem:[%s4 + $0x108] sm:$0xff]
    %v817 = vld [vmem:[%s4 + $0x110] sm:$0xff]
    %v818 = vld [vmem:[%s4 + $0x118] sm:$0xff]
    %v819 = vld [vmem:[%s4 + $0x120] sm:$0xff]
    %v820 = vld [vmem:[%s4 + $0x128] sm:$0xff]
    %v821 = vld [vmem:[%s4 + $0x130] sm:$0xff]
    %v822 = vld [vmem:[%s4 + $0x138] sm:$0xff]
    %v823 = vld [vmem:[%s4 + $0x140] sm:$0xff]
    %v824 = vld [vmem:[%s4 + $0x148] sm:$0xff]
    %v825 = vld [vmem:[%s4 + $0x150] sm:$0xff]
    %v826 = vld [vmem:[%s4 + $0x158] sm:$0xff]
    %v827 = vld [vmem:[%s4 + $0x160] sm:$0xff]
    %v828 = vld [vmem:[%s4 + $0x168] sm:$0xff]
    %v829 = vld [vmem:[%s4 + $0x170] sm:$0xff]
    %v830 = vld [vmem:[%s4 + $0x178] sm:$0xff]
    %v831 = vld [vmem:[%s4 + $0x180] sm:$0xff]
    %v832 = vld [vmem:[%s4 + $0x188] sm:$0xff]
    %v833 = vld [vmem:[%s4 + $0x190] sm:$0xff]
    %v834 = vld [vmem:[%s4 + $0x198] sm:$0xff]
    %v835 = vld [vmem:[%s4 + $0x1a0] sm:$0xff]
    %v836 = vld [vmem:[%s4 + $0x1a8] sm:$0xff]
    %v837 = vld [vmem:[%s4 + $0x1b0] sm:$0xff]
    %v838 = vld [vmem:[%s4 + $0x1b8] sm:$0xff]
    %v839 = vld [vmem:[%s4 + $0x1c0] sm:$0xff]
    %v840 = vld [vmem:[%s4 + $0x1c8] sm:$0xff]
    %v841 = vld [vmem:[%s4 + $0x1d0] sm:$0xff]
    %v842 = vld [vmem:[%s4 + $0x1d8] sm:$0xff]
    %v843 = vld [vmem:[%s4 + $0x1e0] sm:$0xff]
    %v844 = vld [vmem:[%s4 + $0x1e8] sm:$0xff]
    %v845 = vld [vmem:[%s4 + $0x1f0] sm:$0xff]
    %v846 = vld [vmem:[%s4 + $0x1f8] sm:$0xff]
    %v847 = vld [vmem:[%s4 + $0x200] sm:$0xff]
    %v848 = vld [vmem:[%s4 + $0x208] sm:$0xff]
    %v849 = vld [vmem:[%s4 + $0x210] sm:$0xff]
    %v850 = vld [vmem:[%s4 + $0x218] sm:$0xff]
    %v851 = vld [vmem:[%s4 + $0x220] sm:$0xff]
    %v852 = vld [vmem:[%s4 + $0x228] sm:$0xff]
    %v853 = vld [vmem:[%s4 + $0x230] sm:$0xff]
    %v854 = vld [vmem:[%s4 + $0x238] sm:$0xff]
    %v855 = vld [vmem:[%s4 + $0x240] sm:$0xff]
    %v856 = vld [vmem:[%s4 + $0x248] sm:$0xff]
    %v857 = vld [vmem:[%s4 + $0x250] sm:$0xff]
    %v858 = vld [vmem:[%s4 + $0x258] sm:$0xff]
    %v859 = vld [vmem:[%s4 + $0x260] sm:$0xff]
    %v860 = vld [vmem:[%s4 + $0x268] sm:$0xff]
    %v861 = vld [vmem:[%s4 + $0x270] sm:$0xff]
    %v862 = vld [vmem:[%s4 + $0x278] sm:$0xff]
    %v863 = vld [vmem:[%s4 + $0x280] sm:$0xff]
    %v864 = vld [vmem:[%s4 + $0x288] sm:$0xff]
    %v865 = vld [vmem:[%s4 + $0x290] sm:$0xff]
    %v866 = vld [vmem:[%s4 + $0x298] sm:$0xff]
    %v867 = vld [vmem:[%s4 + $0x2a0] sm:$0xff]
    %v868 = vld [vmem:[%s4 + $0x2a8] sm:$0xff]
    %v869 = vld [vmem:[%s4 + $0x2b0] sm:$0xff]
    %v870 = vld [vmem:[%s4 + $0x2b8] sm:$0xff]
    %v871 = vld [vmem:[%s4 + $0x2c0] sm:$0xff]
    %v872 = vld [vmem:[%s4 + $0x2c8] sm:$0xff]
    %v873 = vld [vmem:[%s4 + $0x2d0] sm:$0xff]
    %v874 = vld [vmem:[%s4 + $0x2d8] sm:$0xff]
    %v875 = vld [vmem:[%s4 + $0x2e0] sm:$0xff]
    %v876 = vld [vmem:[%s4 + $0x2e8] sm:$0xff]
    %v877 = vld [vmem:[%s4 + $0x2f0] sm:$0xff]
    %v878 = vld [vmem:[%s4 + $0x2f8] sm:$0xff]
    %v879 = vld [vmem:[%s4 + $0x300] sm:$0xff]
    %v880 = vld [vmem:[%s4 + $0x308] sm:$0xff]
    %v881 = vld [vmem:[%s4 + $0x310] sm:$0xff]
    %v882 = vld [vmem:[%s4 + $0x318] sm:$0xff]
    %v883 = vld [vmem:[%s4 + $0x320] sm:$0xff]
    %v884 = vld [vmem:[%s4 + $0x328] sm:$0xff]
    %v885 = vld [vmem:[%s4 + $0x330] sm:$0xff]
    %v886 = vld [vmem:[%s4 + $0x338] sm:$0xff]
    %v887 = vld [vmem:[%s4 + $0x340] sm:$0xff]
    %v888 = vld [vmem:[%s4 + $0x348] sm:$0xff]
    %v889 = vld [vmem:[%s4 + $0x350] sm:$0xff]
    %v890 = vld [vmem:[%s4 + $0x358] sm:$0xff]
    %v891 = vld [vmem:[%s4 + $0x360] sm:$0xff]
    %v892 = vld [vmem:[%s4 + $0x368] sm:$0xff]
    %v893 = vld [vmem:[%s4 + $0x370] sm:$0xff]
    %v894 = vld [vmem:[%s4 + $0x378] sm:$0xff]
    %v895 = vld [vmem:[%s4 + $0x380] sm:$0xff]
    %v896 = vld [vmem:[%s4 + $0x388] sm:$0xff]
    %v897 = vld [vmem:[%s4 + $0x390] sm:$0xff]
    %v898 = vld [vmem:[%s4 + $0x398] sm:$0xff]
    %v899 = vld [vmem:[%s4 + $0x3a0] sm:$0xff]
    %v900 = vld [vmem:[%s4 + $0x3a8] sm:$0xff]
    %v901 = vld [vmem:[%s4 + $0x3b0] sm:$0xff]
    %v902 = vld [vmem:[%s4 + $0x3b8] sm:$0xff]
    %v903 = vld [vmem:[%s4 + $0x3c0] sm:$0xff]
    %v904 = vld [vmem:[%s4 + $0x3c8] sm:$0xff]
    %v905 = vld [vmem:[%s4 + $0x3d0] sm:$0xff]
    %v906 = vld [vmem:[%s4 + $0x3d8] sm:$0xff]
    %v907 = vld [vmem:[%s4 + $0x3e0] sm:$0xff]
    %v908 = vld [vmem:[%s4 + $0x3e8] sm:$0xff]
    %v909 = vld [vmem:[%s4 + $0x3f0] sm:$0xff]
    %v910 = vld [vmem:[%s4 + $0x3f8] sm:$0xff]
    %v911 = vld [vmem:[%s4 + $0x400] sm:$0xff]
    %v912 = vld [vmem:[%s4 + $0x408] sm:$0xff]
    %v913 = vld [vmem:[%s4 + $0x410] sm:$0xff]
    %v914 = vld [vmem:[%s4 + $0x418] sm:$0xff]
    %v915 = vld [vmem:[%s4 + $0x420] sm:$0xff]
    %v916 = vld [vmem:[%s4 + $0x428] sm:$0xff]
    %v917 = vld [vmem:[%s4 + $0x430] sm:$0xff]
    %v918 = vld [vmem:[%s4 + $0x438] sm:$0xff]
    %v919 = vld [vmem:[%s4 + $0x440] sm:$0xff]
    %v920 = vld [vmem:[%s4 + $0x448] sm:$0xff]
    %v921 = vld [vmem:[%s4 + $0x450] sm:$0xff]
    %v922 = vld [vmem:[%s4 + $0x458] sm:$0xff]
    %v923 = vld [vmem:[%s4 + $0x460] sm:$0xff]
    %v924 = vld [vmem:[%s4 + $0x468] sm:$0xff]
    %v925 = vld [vmem:[%s4 + $0x470] sm:$0xff]
    %v926 = vld [vmem:[%s4 + $0x478] sm:$0xff]
    %v927 = vld [vmem:[%s4 + $0x480] sm:$0xff]
    %v928 = vld [vmem:[%s4 + $0x488] sm:$0xff]
    %v929 = vld [vmem:[%s4 + $0x490] sm:$0xff]
    %v930 = vld [vmem:[%s4 + $0x498] sm:$0xff]
    %v931 = vld [vmem:[%s4 + $0x4a0] sm:$0xff]
    %v932 = vld [vmem:[%s4 + $0x4a8] sm:$0xff]
    %v933 = vld [vmem:[%s4 + $0x4b0] sm:$0xff]
    %v934 = vld [vmem:[%s4 + $0x4b8] sm:$0xff]
    %v935 = vld [vmem:[%s4 + $0x4c0] sm:$0xff]
    %v936 = vld [vmem:[%s4 + $0x4c8] sm:$0xff]
    %v937 = vld [vmem:[%s4 + $0x4d0] sm:$0xff]
    %v938 = vld [vmem:[%s4 + $0x4d8] sm:$0xff]
    %v939 = vld [vmem:[%s4 + $0x4e0] sm:$0xff]
    %v940 = vld [vmem:[%s4 + $0x4e8] sm:$0xff]
    %v941 = vld [vmem:[%s4 + $0x4f0] sm:$0xff]
    %v942 = vld [vmem:[%s4 + $0x4f8] sm:$0xff]
    %v943 = vld [vmem:[%s4 + $0x500] sm:$0xff]
    %v944 = vld [vmem:[%s4 + $0x508] sm:$0xff]
    %v945 = vld [vmem:[%s4 + $0x510] sm:$0xff]
    %v946 = vld [vmem:[%s4 + $0x518] sm:$0xff]
    %v947 = vld [vmem:[%s4 + $0x520] sm:$0xff]
    %v948 = vld [vmem:[%s4 + $0x528] sm:$0xff]
    %v949 = vld [vmem:[%s4 + $0x530] sm:$0xff]
    %v950 = vld [vmem:[%s4 + $0x538] sm:$0xff]
    %v951 = vld [vmem:[%s4 + $0x540] sm:$0xff]
    %v952 = vld [vmem:[%s4 + $0x548] sm:$0xff]
    %v953 = vld [vmem:[%s4 + $0x550] sm:$0xff]
    %v954 = vld [vmem:[%s4 + $0x558] sm:$0xff]
    %v955 = vld [vmem:[%s4 + $0x560] sm:$0xff]
    %v956 = vld [vmem:[%s4 + $0x568] sm:$0xff]
    %v957 = vld [vmem:[%s4 + $0x570] sm:$0xff]
    %v958 = vld [vmem:[%s4 + $0x578] sm:$0xff]
    %v959 = vld [vmem:[%s4 + $0x580] sm:$0xff]
    %v960 = vld [vmem:[%s4 + $0x588] sm:$0xff]
    %v961 = vld [vmem:[%s4 + $0x590] sm:$0xff]
    %v962 = vld [vmem:[%s4 + $0x598] sm:$0xff]
    %v963 = vld [vmem:[%s4 + $0x5a0] sm:$0xff]
    %v964 = vld [vmem:[%s4 + $0x5a8] sm:$0xff]
    %v965 = vld [vmem:[%s4 + $0x5b0] sm:$0xff]
    %v966 = vld [vmem:[%s4 + $0x5b8] sm:$0xff]
    %v967 = vld [vmem:[%s4 + $0x5c0] sm:$0xff]
    %v968 = vld [vmem:[%s4 + $0x5c8] sm:$0xff]
    %v969 = vld [vmem:[%s4 + $0x5d0] sm:$0xff]
    %v970 = vld [vmem:[%s4 + $0x5d8] sm:$0xff]
    %v971 = vld [vmem:[%s4 + $0x5e0] sm:$0xff]
    %v972 = vld [vmem:[%s4 + $0x5e8] sm:$0xff]
    %v973 = vld [vmem:[%s4 + $0x5f0] sm:$0xff]
    %v974 = vld [vmem:[%s4 + $0x5f8] sm:$0xff]
    %v975 = vld [vmem:[%s4 + $0x600] sm:$0xff]
    %v976 = vld [vmem:[%s4 + $0x608] sm:$0xff]
    %v977 = vld [vmem:[%s4 + $0x610] sm:$0xff]
    %v978 = vld [vmem:[%s4 + $0x618] sm:$0xff]
    %v979 = vld [vmem:[%s4 + $0x620] sm:$0xff]
    %v980 = vld [vmem:[%s4 + $0x628] sm:$0xff]
    %v981 = vld [vmem:[%s4 + $0x630] sm:$0xff]
    %v982 = vld [vmem:[%s4 + $0x638] sm:$0xff]
    %v983 = vld [vmem:[%s4 + $0x640] sm:$0xff]
    %v984 = vld [vmem:[%s4 + $0x648] sm:$0xff]
    %v985 = vld [vmem:[%s4 + $0x650] sm:$0xff]
    %v986 = vld [vmem:[%s4 + $0x658] sm:$0xff]
    %v987 = vld [vmem:[%s4 + $0x660] sm:$0xff]
    %v988 = vld [vmem:[%s4 + $0x668] sm:$0xff]
    %v989 = vld [vmem:[%s4 + $0x670] sm:$0xff]
    %v990 = vld [vmem:[%s4 + $0x678] sm:$0xff]
    %v991 = vld [vmem:[%s4 + $0x680] sm:$0xff]
    %v992 = vld [vmem:[%s4 + $0x688] sm:$0xff]
    %v993 = vld [vmem:[%s4 + $0x690] sm:$0xff]
    %v994 = vld [vmem:[%s4 + $0x698] sm:$0xff]
    %v995 = vld [vmem:[%s4 + $0x6a0] sm:$0xff]
    %v996 = vld [vmem:[%s4 + $0x6a8] sm:$0xff]
    %v997 = vld [vmem:[%s4 + $0x6b0] sm:$0xff]
    %v998 = vld [vmem:[%s4 + $0x6b8] sm:$0xff]
    %v999 = vld [vmem:[%s4 + $0x6c0] sm:$0xff]
    %v1000 = vld [vmem:[%s4 + $0x6c8] sm:$0xff]
    %v1001 = vld [vmem:[%s4 + $0x6d0] sm:$0xff]
    %v1002 = vld [vmem:[%s4 + $0x6d8] sm:$0xff]
    %v1003 = vld [vmem:[%s4 + $0x6e0] sm:$0xff]
    %v1004 = vld [vmem:[%s4 + $0x6e8] sm:$0xff]
    %v1005 = vld [vmem:[%s4 + $0x6f0] sm:$0xff]
    %v1006 = vld [vmem:[%s4 + $0x6f8] sm:$0xff]
    %v1007 = vld [vmem:[%s4 + $0x700] sm:$0xff]
    %v1008 = vld [vmem:[%s4 + $0x708] sm:$0xff]
    %v1009 = vld [vmem:[%s4 + $0x710] sm:$0xff]
    %v1010 = vld [vmem:[%s4 + $0x718] sm:$0xff]
    %v1011 = vld [vmem:[%s4 + $0x720] sm:$0xff]
    %v1012 = vld [vmem:[%s4 + $0x728] sm:$0xff]
    %v1013 = vld [vmem:[%s4 + $0x730] sm:$0xff]
    %v1014 = vld [vmem:[%s4 + $0x738] sm:$0xff]
    %v1015 = vld [vmem:[%s4 + $0x740] sm:$0xff]
    %v1016 = vld [vmem:[%s4 + $0x748] sm:$0xff]
    %v1017 = vld [vmem:[%s4 + $0x750] sm:$0xff]
    %v1018 = vld [vmem:[%s4 + $0x758] sm:$0xff]
    %v1019 = vld [vmem:[%s4 + $0x760] sm:$0xff]
    %v1020 = vld [vmem:[%s4 + $0x768] sm:$0xff]
    %v1021 = vld [vmem:[%s4 + $0x770] sm:$0xff]
    %v1022 = vld [vmem:[%s4 + $0x778] sm:$0xff]
    %v1023 = vld [vmem:[%s4 + $0x780] sm:$0xff]
    %v1024 = vld [vmem:[%s4 + $0x788] sm:$0xff]
    %v1025 = vld [vmem:[%s4 + $0x790] sm:$0xff]
    %v1026 = vld [vmem:[%s4 + $0x798] sm:$0xff]
    %v1027 = vld [vmem:[%s4 + $0x7a0] sm:$0xff]
    %v1028 = vld [vmem:[%s4 + $0x7a8] sm:$0xff]
    %v1029 = vld [vmem:[%s4 + $0x7b0] sm:$0xff]
    %v1030 = vld [vmem:[%s4 + $0x7b8] sm:$0xff]
    %v1031 = vld [vmem:[%s4 + $0x7c0] sm:$0xff]
    %v1032 = vld [vmem:[%s4 + $0x7c8] sm:$0xff]
    %v1033 = vld [vmem:[%s4 + $0x7d0] sm:$0xff]
    %v1034 = vld [vmem:[%s4 + $0x7d8] sm:$0xff]
    %v1035 = vld [vmem:[%s4 + $0x7e0] sm:$0xff]
    %v1036 = vld [vmem:[%s4 + $0x7e8] sm:$0xff]
    %v1037 = vld [vmem:[%s4 + $0x7f0] sm:$0xff]
    %v1038 = vld [vmem:[%s4 + $0x7f8] sm:$0xff]
    %v1039 = vld [vmem:[%s5] sm:$0xff]
    %v1040 = vld [vmem:[%s5 + $0x8] sm:$0xff]
    %v1041 = vld [vmem:[%s5 + $0x10] sm:$0xff]
    %v1042 = vld [vmem:[%s5 + $0x18] sm:$0xff]
    %1043 = vmatpush.msra.mxu0 %v813
    %1044 = vmatpush.msra.mxu0 %v811
    %1045 = vmatpush.msra.mxu0 %v809
    %1046 = vmatpush.msra.mxu0 %v807
    %1047 = vmatpush.msra.mxu0 %v805
    %1048 = vmatpush.msra.mxu0 %v803
    %1049 = vmatpush.msra.mxu0 %v801
    %1050 = vmatpush.msra.mxu0 %v799
    %1051 = vmatpush.msra.mxu0 %v797
    %1052 = vmatpush.msra.mxu0 %v795
    %1053 = vmatpush.msra.mxu0 %v793
    %1054 = vmatpush.msra.mxu0 %v791
    %1055 = vmatpush.msra.mxu0 %v789
    %1056 = vmatpush.msra.mxu0 %v787
    %1057 = vmatpush.msra.mxu0 %v785
    %1058 = vmatpush.msra.mxu0 %v783
    %1059 = vmatmul.f32.gmra.mxu0 %v751
    %v1060 = vpop.f32.mrf.mxu0
    %v1061 = vadd.f32 0.0, %v1060
    %1062 = vmatmul.f32.gmra.mxu0 %v767
    %v1063 = vpop.f32.mrf.mxu0
    %v1064 = vadd.f32 0.0, %v1063
    %1065 = vdwg.mxu0
    %1066 = vmatpush.msra.mxu0 %v845
    %1067 = vmatpush.msra.mxu0 %v843
    %1068 = vmatpush.msra.mxu0 %v841
    %1069 = vmatpush.msra.mxu0 %v839
    %1070 = vmatpush.msra.mxu0 %v837
    %1071 = vmatpush.msra.mxu0 %v835
    %1072 = vmatpush.msra.mxu0 %v833
    %1073 = vmatpush.msra.mxu0 %v831
    %1074 = vmatpush.msra.mxu0 %v829
    %1075 = vmatpush.msra.mxu0 %v827
    %1076 = vmatpush.msra.mxu0 %v825
    %1077 = vmatpush.msra.mxu0 %v823
    %1078 = vmatpush.msra.mxu0 %v821
    %1079 = vmatpush.msra.mxu0 %v819
    %1080 = vmatpush.msra.mxu0 %v817
    %1081 = vmatpush.msra.mxu0 %v815
    %1082 = vmatmul.f32.gmra.mxu0 %v752
    %v1083 = vpop.f32.mrf.mxu0
    %v1084 = vadd.f32 %v1061, %v1083
    %1085 = vmatmul.f32.gmra.mxu0 %v768
    %v1086 = vpop.f32.mrf.mxu0
    %v1087 = vadd.f32 %v1064, %v1086
    %1088 = vdwg.mxu0
    %1089 = vmatpush.msra.mxu0 %v877
    %1090 = vmatpush.msra.mxu0 %v875
    %1091 = vmatpush.msra.mxu0 %v873
    %1092 = vmatpush.msra.mxu0 %v871
    %1093 = vmatpush.msra.mxu0 %v869
    %1094 = vmatpush.msra.mxu0 %v867
    %1095 = vmatpush.msra.mxu0 %v865
    %1096 = vmatpush.msra.mxu0 %v863
    %1097 = vmatpush.msra.mxu0 %v861
    %1098 = vmatpush.msra.mxu0 %v859
    %1099 = vmatpush.msra.mxu0 %v857
    %1100 = vmatpush.msra.mxu0 %v855
    %1101 = vmatpush.msra.mxu0 %v853
    %1102 = vmatpush.msra.mxu0 %v851
    %1103 = vmatpush.msra.mxu0 %v849
    %1104 = vmatpush.msra.mxu0 %v847
    %1105 = vmatmul.f32.gmra.mxu0 %v753
    %v1106 = vpop.f32.mrf.mxu0
    %v1107 = vadd.f32 %v1084, %v1106
    %1108 = vmatmul.f32.gmra.mxu0 %v769
    %v1109 = vpop.f32.mrf.mxu0
    %v1110 = vadd.f32 %v1087, %v1109
    %1111 = vdwg.mxu0
    %1112 = vmatpush.msra.mxu0 %v909
    %1113 = vmatpush.msra.mxu0 %v907
    %1114 = vmatpush.msra.mxu0 %v905
    %1115 = vmatpush.msra.mxu0 %v903
    %1116 = vmatpush.msra.mxu0 %v901
    %1117 = vmatpush.msra.mxu0 %v899
    %1118 = vmatpush.msra.mxu0 %v897
    %1119 = vmatpush.msra.mxu0 %v895
    %1120 = vmatpush.msra.mxu0 %v893
    %1121 = vmatpush.msra.mxu0 %v891
    %1122 = vmatpush.msra.mxu0 %v889
    %1123 = vmatpush.msra.mxu0 %v887
    %1124 = vmatpush.msra.mxu0 %v885
    %1125 = vmatpush.msra.mxu0 %v883
    %1126 = vmatpush.msra.mxu0 %v881
    %1127 = vmatpush.msra.mxu0 %v879
    %1128 = vmatmul.f32.gmra.mxu0 %v754
    %v1129 = vpop.f32.mrf.mxu0
    %v1130 = vadd.f32 %v1107, %v1129
    %1131 = vmatmul.f32.gmra.mxu0 %v770
    %v1132 = vpop.f32.mrf.mxu0
    %v1133 = vadd.f32 %v1110, %v1132
    %1134 = vdwg.mxu0
    %1135 = vmatpush.msra.mxu0 %v941
    %1136 = vmatpush.msra.mxu0 %v939
    %1137 = vmatpush.msra.mxu0 %v937
    %1138 = vmatpush.msra.mxu0 %v935
    %1139 = vmatpush.msra.mxu0 %v933
    %1140 = vmatpush.msra.mxu0 %v931
    %1141 = vmatpush.msra.mxu0 %v929
    %1142 = vmatpush.msra.mxu0 %v927
    %1143 = vmatpush.msra.mxu0 %v925
    %1144 = vmatpush.msra.mxu0 %v923
    %1145 = vmatpush.msra.mxu0 %v921
    %1146 = vmatpush.msra.mxu0 %v919
    %1147 = vmatpush.msra.mxu0 %v917
    %1148 = vmatpush.msra.mxu0 %v915
    %1149 = vmatpush.msra.mxu0 %v913
    %1150 = vmatpush.msra.mxu0 %v911
    %1151 = vmatmul.f32.gmra.mxu0 %v755
    %v1152 = vpop.f32.mrf.mxu0
    %v1153 = vadd.f32 %v1130, %v1152
    %1154 = vmatmul.f32.gmra.mxu0 %v771
    %v1155 = vpop.f32.mrf.mxu0
    %v1156 = vadd.f32 %v1133, %v1155
    %1157 = vdwg.mxu0
    %1158 = vmatpush.msra.mxu0 %v973
    %1159 = vmatpush.msra.mxu0 %v971
    %1160 = vmatpush.msra.mxu0 %v969
    %1161 = vmatpush.msra.mxu0 %v967
    %1162 = vmatpush.msra.mxu0 %v965
    %1163 = vmatpush.msra.mxu0 %v963
    %1164 = vmatpush.msra.mxu0 %v961
    %1165 = vmatpush.msra.mxu0 %v959
    %1166 = vmatpush.msra.mxu0 %v957
    %1167 = vmatpush.msra.mxu0 %v955
    %1168 = vmatpush.msra.mxu0 %v953
    %1169 = vmatpush.msra.mxu0 %v951
    %1170 = vmatpush.msra.mxu0 %v949
    %1171 = vmatpush.msra.mxu0 %v947
    %1172 = vmatpush.msra.mxu0 %v945
    %1173 = vmatpush.msra.mxu0 %v943
    %1174 = vmatmul.f32.gmra.mxu0 %v756
    %v1175 = vpop.f32.mrf.mxu0
    %v1176 = vadd.f32 %v1153, %v1175
    %1177 = vmatmul.f32.gmra.mxu0 %v772
    %v1178 = vpop.f32.mrf.mxu0
    %v1179 = vadd.f32 %v1156, %v1178
    %1180 = vdwg.mxu0
    %1181 = vmatpush.msra.mxu0 %v1005
    %1182 = vmatpush.msra.mxu0 %v1003
    %1183 = vmatpush.msra.mxu0 %v1001
    %1184 = vmatpush.msra.mxu0 %v999
    %1185 = vmatpush.msra.mxu0 %v997
    %1186 = vmatpush.msra.mxu0 %v995
    %1187 = vmatpush.msra.mxu0 %v993
    %1188 = vmatpush.msra.mxu0 %v991
    %1189 = vmatpush.msra.mxu0 %v989
    %1190 = vmatpush.msra.mxu0 %v987
    %1191 = vmatpush.msra.mxu0 %v985
    %1192 = vmatpush.msra.mxu0 %v983
    %1193 = vmatpush.msra.mxu0 %v981
    %1194 = vmatpush.msra.mxu0 %v979
    %1195 = vmatpush.msra.mxu0 %v977
    %1196 = vmatpush.msra.mxu0 %v975
    %1197 = vmatmul.f32.gmra.mxu0 %v757
    %v1198 = vpop.f32.mrf.mxu0
    %v1199 = vadd.f32 %v1176, %v1198
    %1200 = vmatmul.f32.gmra.mxu0 %v773
    %v1201 = vpop.f32.mrf.mxu0
    %v1202 = vadd.f32 %v1179, %v1201
    %1203 = vdwg.mxu0
    %1204 = vmatpush.msra.mxu0 %v1037
    %1205 = vmatpush.msra.mxu0 %v1035
    %1206 = vmatpush.msra.mxu0 %v1033
    %1207 = vmatpush.msra.mxu0 %v1031
    %1208 = vmatpush.msra.mxu0 %v1029
    %1209 = vmatpush.msra.mxu0 %v1027
    %1210 = vmatpush.msra.mxu0 %v1025
    %1211 = vmatpush.msra.mxu0 %v1023
    %1212 = vmatpush.msra.mxu0 %v1021
    %1213 = vmatpush.msra.mxu0 %v1019
    %1214 = vmatpush.msra.mxu0 %v1017
    %1215 = vmatpush.msra.mxu0 %v1015
    %1216 = vmatpush.msra.mxu0 %v1013
    %1217 = vmatpush.msra.mxu0 %v1011
    %1218 = vmatpush.msra.mxu0 %v1009
    %1219 = vmatpush.msra.mxu0 %v1007
    %1220 = vmatmul.f32.gmra.mxu0 %v758
    %v1221 = vpop.f32.mrf.mxu0
    %v1222 = vadd.f32 %v1199, %v1221
    %1223 = vmatmul.f32.gmra.mxu0 %v774
    %v1224 = vpop.f32.mrf.mxu0
    %v1225 = vadd.f32 %v1202, %v1224
    %1226 = vdwg.mxu0
    %1227 = vmatpush.msra.mxu0 %v814
    %1228 = vmatpush.msra.mxu0 %v812
    %1229 = vmatpush.msra.mxu0 %v810
    %1230 = vmatpush.msra.mxu0 %v808
    %1231 = vmatpush.msra.mxu0 %v806
    %1232 = vmatpush.msra.mxu0 %v804
    %1233 = vmatpush.msra.mxu0 %v802
    %1234 = vmatpush.msra.mxu0 %v800
    %1235 = vmatpush.msra.mxu0 %v798
    %1236 = vmatpush.msra.mxu0 %v796
    %1237 = vmatpush.msra.mxu0 %v794
    %1238 = vmatpush.msra.mxu0 %v792
    %1239 = vmatpush.msra.mxu0 %v790
    %1240 = vmatpush.msra.mxu0 %v788
    %1241 = vmatpush.msra.mxu0 %v786
    %1242 = vmatpush.msra.mxu0 %v784
    %1243 = vmatmul.f32.gmra.mxu0 %v751
    %v1244 = vpop.f32.mrf.mxu0
    %v1245 = vadd.f32 0.0, %v1244
    %1246 = vmatmul.f32.gmra.mxu0 %v767
    %v1247 = vpop.f32.mrf.mxu0
    %v1248 = vadd.f32 0.0, %v1247
    %1249 = vdwg.mxu0
    %1250 = vmatpush.msra.mxu0 %v846
    %1251 = vmatpush.msra.mxu0 %v844
    %1252 = vmatpush.msra.mxu0 %v842
    %1253 = vmatpush.msra.mxu0 %v840
    %1254 = vmatpush.msra.mxu0 %v838
    %1255 = vmatpush.msra.mxu0 %v836
    %1256 = vmatpush.msra.mxu0 %v834
    %1257 = vmatpush.msra.mxu0 %v832
    %1258 = vmatpush.msra.mxu0 %v830
    %1259 = vmatpush.msra.mxu0 %v828
    %1260 = vmatpush.msra.mxu0 %v826
    %1261 = vmatpush.msra.mxu0 %v824
    %1262 = vmatpush.msra.mxu0 %v822
    %1263 = vmatpush.msra.mxu0 %v820
    %1264 = vmatpush.msra.mxu0 %v818
    %1265 = vmatpush.msra.mxu0 %v816
    %1266 = vmatmul.f32.gmra.mxu0 %v752
    %v1267 = vpop.f32.mrf.mxu0
    %v1268 = vadd.f32 %v1245, %v1267
    %1269 = vmatmul.f32.gmra.mxu0 %v768
    %v1270 = vpop.f32.mrf.mxu0
    %v1271 = vadd.f32 %v1248, %v1270
    %1272 = vdwg.mxu0
    %1273 = vmatpush.msra.mxu0 %v878
    %1274 = vmatpush.msra.mxu0 %v876
    %1275 = vmatpush.msra.mxu0 %v874
    %1276 = vmatpush.msra.mxu0 %v872
    %1277 = vmatpush.msra.mxu0 %v870
    %1278 = vmatpush.msra.mxu0 %v868
    %1279 = vmatpush.msra.mxu0 %v866
    %1280 = vmatpush.msra.mxu0 %v864
    %1281 = vmatpush.msra.mxu0 %v862
    %1282 = vmatpush.msra.mxu0 %v860
    %1283 = vmatpush.msra.mxu0 %v858
    %1284 = vmatpush.msra.mxu0 %v856
    %1285 = vmatpush.msra.mxu0 %v854
    %1286 = vmatpush.msra.mxu0 %v852
    %1287 = vmatpush.msra.mxu0 %v850
    %1288 = vmatpush.msra.mxu0 %v848
    %1289 = vmatmul.f32.gmra.mxu0 %v753
    %v1290 = vpop.f32.mrf.mxu0
    %v1291 = vadd.f32 %v1268, %v1290
    %1292 = vmatmul.f32.gmra.mxu0 %v769
    %v1293 = vpop.f32.mrf.mxu0
    %v1294 = vadd.f32 %v1271, %v1293
    %1295 = vdwg.mxu0
    %1296 = vmatpush.msra.mxu0 %v910
    %1297 = vmatpush.msra.mxu0 %v908
    %1298 = vmatpush.msra.mxu0 %v906
    %1299 = vmatpush.msra.mxu0 %v904
    %1300 = vmatpush.msra.mxu0 %v902
    %1301 = vmatpush.msra.mxu0 %v900
    %1302 = vmatpush.msra.mxu0 %v898
    %1303 = vmatpush.msra.mxu0 %v896
    %1304 = vmatpush.msra.mxu0 %v894
    %1305 = vmatpush.msra.mxu0 %v892
    %1306 = vmatpush.msra.mxu0 %v890
    %1307 = vmatpush.msra.mxu0 %v888
    %1308 = vmatpush.msra.mxu0 %v886
    %1309 = vmatpush.msra.mxu0 %v884
    %1310 = vmatpush.msra.mxu0 %v882
    %1311 = vmatpush.msra.mxu0 %v880
    %1312 = vmatmul.f32.gmra.mxu0 %v754
    %v1313 = vpop.f32.mrf.mxu0
    %v1314 = vadd.f32 %v1291, %v1313
    %1315 = vmatmul.f32.gmra.mxu0 %v770
    %v1316 = vpop.f32.mrf.mxu0
    %v1317 = vadd.f32 %v1294, %v1316
    %1318 = vdwg.mxu0
    %1319 = vmatpush.msra.mxu0 %v942
    %1320 = vmatpush.msra.mxu0 %v940
    %1321 = vmatpush.msra.mxu0 %v938
    %1322 = vmatpush.msra.mxu0 %v936
    %1323 = vmatpush.msra.mxu0 %v934
    %1324 = vmatpush.msra.mxu0 %v932
    %1325 = vmatpush.msra.mxu0 %v930
    %1326 = vmatpush.msra.mxu0 %v928
    %1327 = vmatpush.msra.mxu0 %v926
    %1328 = vmatpush.msra.mxu0 %v924
    %1329 = vmatpush.msra.mxu0 %v922
    %1330 = vmatpush.msra.mxu0 %v920
    %1331 = vmatpush.msra.mxu0 %v918
    %1332 = vmatpush.msra.mxu0 %v916
    %1333 = vmatpush.msra.mxu0 %v914
    %1334 = vmatpush.msra.mxu0 %v912
    %1335 = vmatmul.f32.gmra.mxu0 %v755
    %v1336 = vpop.f32.mrf.mxu0
    %v1337 = vadd.f32 %v1314, %v1336
    %1338 = vmatmul.f32.gmra.mxu0 %v771
    %v1339 = vpop.f32.mrf.mxu0
    %v1340 = vadd.f32 %v1317, %v1339
    %1341 = vdwg.mxu0
    %1342 = vmatpush.msra.mxu0 %v974
    %1343 = vmatpush.msra.mxu0 %v972
    %1344 = vmatpush.msra.mxu0 %v970
    %1345 = vmatpush.msra.mxu0 %v968
    %1346 = vmatpush.msra.mxu0 %v966
    %1347 = vmatpush.msra.mxu0 %v964
    %1348 = vmatpush.msra.mxu0 %v962
    %1349 = vmatpush.msra.mxu0 %v960
    %1350 = vmatpush.msra.mxu0 %v958
    %1351 = vmatpush.msra.mxu0 %v956
    %1352 = vmatpush.msra.mxu0 %v954
    %1353 = vmatpush.msra.mxu0 %v952
    %1354 = vmatpush.msra.mxu0 %v950
    %1355 = vmatpush.msra.mxu0 %v948
    %1356 = vmatpush.msra.mxu0 %v946
    %1357 = vmatpush.msra.mxu0 %v944
    %1358 = vmatmul.f32.gmra.mxu0 %v756
    %v1359 = vpop.f32.mrf.mxu0
    %v1360 = vadd.f32 %v1337, %v1359
    %1361 = vmatmul.f32.gmra.mxu0 %v772
    %v1362 = vpop.f32.mrf.mxu0
    %v1363 = vadd.f32 %v1340, %v1362
    %1364 = vdwg.mxu0
    %1365 = vmatpush.msra.mxu0 %v1006
    %1366 = vmatpush.msra.mxu0 %v1004
    %1367 = vmatpush.msra.mxu0 %v1002
    %1368 = vmatpush.msra.mxu0 %v1000
    %1369 = vmatpush.msra.mxu0 %v998
    %1370 = vmatpush.msra.mxu0 %v996
    %1371 = vmatpush.msra.mxu0 %v994
    %1372 = vmatpush.msra.mxu0 %v992
    %1373 = vmatpush.msra.mxu0 %v990
    %1374 = vmatpush.msra.mxu0 %v988
    %1375 = vmatpush.msra.mxu0 %v986
    %1376 = vmatpush.msra.mxu0 %v984
    %1377 = vmatpush.msra.mxu0 %v982
    %1378 = vmatpush.msra.mxu0 %v980
    %1379 = vmatpush.msra.mxu0 %v978
    %1380 = vmatpush.msra.mxu0 %v976
    %1381 = vmatmul.f32.gmra.mxu0 %v757
    %v1382 = vpop.f32.mrf.mxu0
    %v1383 = vadd.f32 %v1360, %v1382
    %1384 = vmatmul.f32.gmra.mxu0 %v773
    %v1385 = vpop.f32.mrf.mxu0
    %v1386 = vadd.f32 %v1363, %v1385
    %1387 = vdwg.mxu0
    %1388 = vmatpush.msra.mxu0 %v1038
    %1389 = vmatpush.msra.mxu0 %v1036
    %1390 = vmatpush.msra.mxu0 %v1034
    %1391 = vmatpush.msra.mxu0 %v1032
    %1392 = vmatpush.msra.mxu0 %v1030
    %1393 = vmatpush.msra.mxu0 %v1028
    %1394 = vmatpush.msra.mxu0 %v1026
    %1395 = vmatpush.msra.mxu0 %v1024
    %1396 = vmatpush.msra.mxu0 %v1022
    %1397 = vmatpush.msra.mxu0 %v1020
    %1398 = vmatpush.msra.mxu0 %v1018
    %1399 = vmatpush.msra.mxu0 %v1016
    %1400 = vmatpush.msra.mxu0 %v1014
    %1401 = vmatpush.msra.mxu0 %v1012
    %1402 = vmatpush.msra.mxu0 %v1010
    %1403 = vmatpush.msra.mxu0 %v1008
    %1404 = vmatmul.f32.gmra.mxu0 %v758
    %v1405 = vpop.f32.mrf.mxu0
    %v1406 = vadd.f32 %v1383, %v1405
    %1407 = vmatmul.f32.gmra.mxu0 %v774
    %v1408 = vpop.f32.mrf.mxu0
    %v1409 = vadd.f32 %v1386, %v1408
    %1410 = vdwg.mxu0
    %v1411 = vmul.f32 %v1222, %v1039
    %v1412 = vmul.f32 %v1406, %v1040
    %v1413 = vmul.f32 %v1225, %v1041
    %v1414 = vmul.f32 %v1409, %v1042
    %v1415 = vadd.f32 %v1411, %v1413
    %v1416 = vrot.slane %v1415, 4
    %v1417 = vadd.f32 %v1415, %v1416
    %v1418 = vrot.slane %v1417, 2
    %v1419 = vadd.f32 %v1417, %v1418
    %v1420 = vrot.slane %v1419, 1
    %v1421 = vadd.f32 %v1419, %v1420
    %vm1422 = vcmask 261120
    %v1423 = vsel %vm1422, %v1412, 0.0
    %v1424 = vsel %vm1422, %v1414, 0.0
    %v1425 = vadd.f32 %v1423, %v1424
    %v1426 = vrot.slane %v1425, 4
    %v1427 = vadd.f32 %v1425, %v1426
    %v1428 = vrot.slane %v1427, 2
    %v1429 = vadd.f32 %v1427, %v1428
    %v1430 = vrot.slane %v1429, 1
    %v1431 = vadd.f32 %v1429, %v1430
    %1432 = vmatpush.msra.mxu0 %v813
    %1433 = vmatpush.msra.mxu0 %v811
    %1434 = vmatpush.msra.mxu0 %v809
    %1435 = vmatpush.msra.mxu0 %v807
    %1436 = vmatpush.msra.mxu0 %v805
    %1437 = vmatpush.msra.mxu0 %v803
    %1438 = vmatpush.msra.mxu0 %v801
    %1439 = vmatpush.msra.mxu0 %v799
    %1440 = vmatpush.msra.mxu0 %v797
    %1441 = vmatpush.msra.mxu0 %v795
    %1442 = vmatpush.msra.mxu0 %v793
    %1443 = vmatpush.msra.mxu0 %v791
    %1444 = vmatpush.msra.mxu0 %v789
    %1445 = vmatpush.msra.mxu0 %v787
    %1446 = vmatpush.msra.mxu0 %v785
    %1447 = vmatpush.msra.mxu0 %v783
    %1448 = vmatmul.f32.gmra.mxu0 %v759
    %v1449 = vpop.f32.mrf.mxu0
    %v1450 = vadd.f32 0.0, %v1449
    %1451 = vmatmul.f32.gmra.mxu0 %v775
    %v1452 = vpop.f32.mrf.mxu0
    %v1453 = vadd.f32 0.0, %v1452
    %1454 = vdwg.mxu0
    %1455 = vmatpush.msra.mxu0 %v845
    %1456 = vmatpush.msra.mxu0 %v843
    %1457 = vmatpush.msra.mxu0 %v841
    %1458 = vmatpush.msra.mxu0 %v839
    %1459 = vmatpush.msra.mxu0 %v837
    %1460 = vmatpush.msra.mxu0 %v835
    %1461 = vmatpush.msra.mxu0 %v833
    %1462 = vmatpush.msra.mxu0 %v831
    %1463 = vmatpush.msra.mxu0 %v829
    %1464 = vmatpush.msra.mxu0 %v827
    %1465 = vmatpush.msra.mxu0 %v825
    %1466 = vmatpush.msra.mxu0 %v823
    %1467 = vmatpush.msra.mxu0 %v821
    %1468 = vmatpush.msra.mxu0 %v819
    %1469 = vmatpush.msra.mxu0 %v817
    %1470 = vmatpush.msra.mxu0 %v815
    %1471 = vmatmul.f32.gmra.mxu0 %v760
    %v1472 = vpop.f32.mrf.mxu0
    %v1473 = vadd.f32 %v1450, %v1472
    %1474 = vmatmul.f32.gmra.mxu0 %v776
    %v1475 = vpop.f32.mrf.mxu0
    %v1476 = vadd.f32 %v1453, %v1475
    %1477 = vdwg.mxu0
    %1478 = vmatpush.msra.mxu0 %v877
    %1479 = vmatpush.msra.mxu0 %v875
    %1480 = vmatpush.msra.mxu0 %v873
    %1481 = vmatpush.msra.mxu0 %v871
    %1482 = vmatpush.msra.mxu0 %v869
    %1483 = vmatpush.msra.mxu0 %v867
    %1484 = vmatpush.msra.mxu0 %v865
    %1485 = vmatpush.msra.mxu0 %v863
    %1486 = vmatpush.msra.mxu0 %v861
    %1487 = vmatpush.msra.mxu0 %v859
    %1488 = vmatpush.msra.mxu0 %v857
    %1489 = vmatpush.msra.mxu0 %v855
    %1490 = vmatpush.msra.mxu0 %v853
    %1491 = vmatpush.msra.mxu0 %v851
    %1492 = vmatpush.msra.mxu0 %v849
    %1493 = vmatpush.msra.mxu0 %v847
    %1494 = vmatmul.f32.gmra.mxu0 %v761
    %v1495 = vpop.f32.mrf.mxu0
    %v1496 = vadd.f32 %v1473, %v1495
    %1497 = vmatmul.f32.gmra.mxu0 %v777
    %v1498 = vpop.f32.mrf.mxu0
    %v1499 = vadd.f32 %v1476, %v1498
    %1500 = vdwg.mxu0
    %1501 = vmatpush.msra.mxu0 %v909
    %1502 = vmatpush.msra.mxu0 %v907
    %1503 = vmatpush.msra.mxu0 %v905
    %1504 = vmatpush.msra.mxu0 %v903
    %1505 = vmatpush.msra.mxu0 %v901
    %1506 = vmatpush.msra.mxu0 %v899
    %1507 = vmatpush.msra.mxu0 %v897
    %1508 = vmatpush.msra.mxu0 %v895
    %1509 = vmatpush.msra.mxu0 %v893
    %1510 = vmatpush.msra.mxu0 %v891
    %1511 = vmatpush.msra.mxu0 %v889
    %1512 = vmatpush.msra.mxu0 %v887
    %1513 = vmatpush.msra.mxu0 %v885
    %1514 = vmatpush.msra.mxu0 %v883
    %1515 = vmatpush.msra.mxu0 %v881
    %1516 = vmatpush.msra.mxu0 %v879
    %1517 = vmatmul.f32.gmra.mxu0 %v762
    %v1518 = vpop.f32.mrf.mxu0
    %v1519 = vadd.f32 %v1496, %v1518
    %1520 = vmatmul.f32.gmra.mxu0 %v778
    %v1521 = vpop.f32.mrf.mxu0
    %v1522 = vadd.f32 %v1499, %v1521
    %1523 = vdwg.mxu0
    %1524 = vmatpush.msra.mxu0 %v941
    %1525 = vmatpush.msra.mxu0 %v939
    %1526 = vmatpush.msra.mxu0 %v937
    %1527 = vmatpush.msra.mxu0 %v935
    %1528 = vmatpush.msra.mxu0 %v933
    %1529 = vmatpush.msra.mxu0 %v931
    %1530 = vmatpush.msra.mxu0 %v929
    %1531 = vmatpush.msra.mxu0 %v927
    %1532 = vmatpush.msra.mxu0 %v925
    %1533 = vmatpush.msra.mxu0 %v923
    %1534 = vmatpush.msra.mxu0 %v921
    %1535 = vmatpush.msra.mxu0 %v919
    %1536 = vmatpush.msra.mxu0 %v917
    %1537 = vmatpush.msra.mxu0 %v915
    %1538 = vmatpush.msra.mxu0 %v913
    %1539 = vmatpush.msra.mxu0 %v911
    %1540 = vmatmul.f32.gmra.mxu0 %v763
    %v1541 = vpop.f32.mrf.mxu0
    %v1542 = vadd.f32 %v1519, %v1541
    %1543 = vmatmul.f32.gmra.mxu0 %v779
    %v1544 = vpop.f32.mrf.mxu0
    %v1545 = vadd.f32 %v1522, %v1544
    %1546 = vdwg.mxu0
    %1547 = vmatpush.msra.mxu0 %v973
    %1548 = vmatpush.msra.mxu0 %v971
    %1549 = vmatpush.msra.mxu0 %v969
    %1550 = vmatpush.msra.mxu0 %v967
    %1551 = vmatpush.msra.mxu0 %v965
    %1552 = vmatpush.msra.mxu0 %v963
    %1553 = vmatpush.msra.mxu0 %v961
    %1554 = vmatpush.msra.mxu0 %v959
    %1555 = vmatpush.msra.mxu0 %v957
    %1556 = vmatpush.msra.mxu0 %v955
    %1557 = vmatpush.msra.mxu0 %v953
    %1558 = vmatpush.msra.mxu0 %v951
    %1559 = vmatpush.msra.mxu0 %v949
    %1560 = vmatpush.msra.mxu0 %v947
    %1561 = vmatpush.msra.mxu0 %v945
    %1562 = vmatpush.msra.mxu0 %v943
    %1563 = vmatmul.f32.gmra.mxu0 %v764
    %v1564 = vpop.f32.mrf.mxu0
    %v1565 = vadd.f32 %v1542, %v1564
    %1566 = vmatmul.f32.gmra.mxu0 %v780
    %v1567 = vpop.f32.mrf.mxu0
    %v1568 = vadd.f32 %v1545, %v1567
    %1569 = vdwg.mxu0
    %1570 = vmatpush.msra.mxu0 %v1005
    %1571 = vmatpush.msra.mxu0 %v1003
    %1572 = vmatpush.msra.mxu0 %v1001
    %1573 = vmatpush.msra.mxu0 %v999
    %1574 = vmatpush.msra.mxu0 %v997
    %1575 = vmatpush.msra.mxu0 %v995
    %1576 = vmatpush.msra.mxu0 %v993
    %1577 = vmatpush.msra.mxu0 %v991
    %1578 = vmatpush.msra.mxu0 %v989
    %1579 = vmatpush.msra.mxu0 %v987
    %1580 = vmatpush.msra.mxu0 %v985
    %1581 = vmatpush.msra.mxu0 %v983
    %1582 = vmatpush.msra.mxu0 %v981
    %1583 = vmatpush.msra.mxu0 %v979
    %1584 = vmatpush.msra.mxu0 %v977
    %1585 = vmatpush.msra.mxu0 %v975
    %1586 = vmatmul.f32.gmra.mxu0 %v765
    %v1587 = vpop.f32.mrf.mxu0
    %v1588 = vadd.f32 %v1565, %v1587
    %1589 = vmatmul.f32.gmra.mxu0 %v781
    %v1590 = vpop.f32.mrf.mxu0
    %v1591 = vadd.f32 %v1568, %v1590
    %1592 = vdwg.mxu0
    %1593 = vmatpush.msra.mxu0 %v1037
    %1594 = vmatpush.msra.mxu0 %v1035
    %1595 = vmatpush.msra.mxu0 %v1033
    %1596 = vmatpush.msra.mxu0 %v1031
    %1597 = vmatpush.msra.mxu0 %v1029
    %1598 = vmatpush.msra.mxu0 %v1027
    %1599 = vmatpush.msra.mxu0 %v1025
    %1600 = vmatpush.msra.mxu0 %v1023
    %1601 = vmatpush.msra.mxu0 %v1021
    %1602 = vmatpush.msra.mxu0 %v1019
    %1603 = vmatpush.msra.mxu0 %v1017
    %1604 = vmatpush.msra.mxu0 %v1015
    %1605 = vmatpush.msra.mxu0 %v1013
    %1606 = vmatpush.msra.mxu0 %v1011
    %1607 = vmatpush.msra.mxu0 %v1009
    %1608 = vmatpush.msra.mxu0 %v1007
    %1609 = vmatmul.f32.gmra.mxu0 %v766
    %v1610 = vpop.f32.mrf.mxu0
    %v1611 = vadd.f32 %v1588, %v1610
    %1612 = vmatmul.f32.gmra.mxu0 %v782
    %v1613 = vpop.f32.mrf.mxu0
    %v1614 = vadd.f32 %v1591, %v1613
    %1615 = vdwg.mxu0
    %1616 = vmatpush.msra.mxu0 %v814
    %1617 = vmatpush.msra.mxu0 %v812
    %1618 = vmatpush.msra.mxu0 %v810
    %1619 = vmatpush.msra.mxu0 %v808
    %1620 = vmatpush.msra.mxu0 %v806
    %1621 = vmatpush.msra.mxu0 %v804
    %1622 = vmatpush.msra.mxu0 %v802
    %1623 = vmatpush.msra.mxu0 %v800
    %1624 = vmatpush.msra.mxu0 %v798
    %1625 = vmatpush.msra.mxu0 %v796
    %1626 = vmatpush.msra.mxu0 %v794
    %1627 = vmatpush.msra.mxu0 %v792
    %1628 = vmatpush.msra.mxu0 %v790
    %1629 = vmatpush.msra.mxu0 %v788
    %1630 = vmatpush.msra.mxu0 %v786
    %1631 = vmatpush.msra.mxu0 %v784
    %1632 = vmatmul.f32.gmra.mxu0 %v759
    %v1633 = vpop.f32.mrf.mxu0
    %v1634 = vadd.f32 0.0, %v1633
    %1635 = vmatmul.f32.gmra.mxu0 %v775
    %v1636 = vpop.f32.mrf.mxu0
    %v1637 = vadd.f32 0.0, %v1636
    %1638 = vdwg.mxu0
    %1639 = vmatpush.msra.mxu0 %v846
    %1640 = vmatpush.msra.mxu0 %v844
    %1641 = vmatpush.msra.mxu0 %v842
    %1642 = vmatpush.msra.mxu0 %v840
    %1643 = vmatpush.msra.mxu0 %v838
    %1644 = vmatpush.msra.mxu0 %v836
    %1645 = vmatpush.msra.mxu0 %v834
    %1646 = vmatpush.msra.mxu0 %v832
    %1647 = vmatpush.msra.mxu0 %v830
    %1648 = vmatpush.msra.mxu0 %v828
    %1649 = vmatpush.msra.mxu0 %v826
    %1650 = vmatpush.msra.mxu0 %v824
    %1651 = vmatpush.msra.mxu0 %v822
    %1652 = vmatpush.msra.mxu0 %v820
    %1653 = vmatpush.msra.mxu0 %v818
    %1654 = vmatpush.msra.mxu0 %v816
    %1655 = vmatmul.f32.gmra.mxu0 %v760
    %v1656 = vpop.f32.mrf.mxu0
    %v1657 = vadd.f32 %v1634, %v1656
    %1658 = vmatmul.f32.gmra.mxu0 %v776
    %v1659 = vpop.f32.mrf.mxu0
    %v1660 = vadd.f32 %v1637, %v1659
    %1661 = vdwg.mxu0
    %1662 = vmatpush.msra.mxu0 %v878
    %1663 = vmatpush.msra.mxu0 %v876
    %1664 = vmatpush.msra.mxu0 %v874
    %1665 = vmatpush.msra.mxu0 %v872
    %1666 = vmatpush.msra.mxu0 %v870
    %1667 = vmatpush.msra.mxu0 %v868
    %1668 = vmatpush.msra.mxu0 %v866
    %1669 = vmatpush.msra.mxu0 %v864
    %1670 = vmatpush.msra.mxu0 %v862
    %1671 = vmatpush.msra.mxu0 %v860
    %1672 = vmatpush.msra.mxu0 %v858
    %1673 = vmatpush.msra.mxu0 %v856
    %1674 = vmatpush.msra.mxu0 %v854
    %1675 = vmatpush.msra.mxu0 %v852
    %1676 = vmatpush.msra.mxu0 %v850
    %1677 = vmatpush.msra.mxu0 %v848
    %1678 = vmatmul.f32.gmra.mxu0 %v761
    %v1679 = vpop.f32.mrf.mxu0
    %v1680 = vadd.f32 %v1657, %v1679
    %1681 = vmatmul.f32.gmra.mxu0 %v777
    %v1682 = vpop.f32.mrf.mxu0
    %v1683 = vadd.f32 %v1660, %v1682
    %1684 = vdwg.mxu0
    %1685 = vmatpush.msra.mxu0 %v910
    %1686 = vmatpush.msra.mxu0 %v908
    %1687 = vmatpush.msra.mxu0 %v906
    %1688 = vmatpush.msra.mxu0 %v904
    %1689 = vmatpush.msra.mxu0 %v902
    %1690 = vmatpush.msra.mxu0 %v900
    %1691 = vmatpush.msra.mxu0 %v898
    %1692 = vmatpush.msra.mxu0 %v896
    %1693 = vmatpush.msra.mxu0 %v894
    %1694 = vmatpush.msra.mxu0 %v892
    %1695 = vmatpush.msra.mxu0 %v890
    %1696 = vmatpush.msra.mxu0 %v888
    %1697 = vmatpush.msra.mxu0 %v886
    %1698 = vmatpush.msra.mxu0 %v884
    %1699 = vmatpush.msra.mxu0 %v882
    %1700 = vmatpush.msra.mxu0 %v880
    %1701 = vmatmul.f32.gmra.mxu0 %v762
    %v1702 = vpop.f32.mrf.mxu0
    %v1703 = vadd.f32 %v1680, %v1702
    %1704 = vmatmul.f32.gmra.mxu0 %v778
    %v1705 = vpop.f32.mrf.mxu0
    %v1706 = vadd.f32 %v1683, %v1705
    %1707 = vdwg.mxu0
    %1708 = vmatpush.msra.mxu0 %v942
    %1709 = vmatpush.msra.mxu0 %v940
    %1710 = vmatpush.msra.mxu0 %v938
    %1711 = vmatpush.msra.mxu0 %v936
    %1712 = vmatpush.msra.mxu0 %v934
    %1713 = vmatpush.msra.mxu0 %v932
    %1714 = vmatpush.msra.mxu0 %v930
    %1715 = vmatpush.msra.mxu0 %v928
    %1716 = vmatpush.msra.mxu0 %v926
    %1717 = vmatpush.msra.mxu0 %v924
    %1718 = vmatpush.msra.mxu0 %v922
    %1719 = vmatpush.msra.mxu0 %v920
    %1720 = vmatpush.msra.mxu0 %v918
    %1721 = vmatpush.msra.mxu0 %v916
    %1722 = vmatpush.msra.mxu0 %v914
    %1723 = vmatpush.msra.mxu0 %v912
    %1724 = vmatmul.f32.gmra.mxu0 %v763
    %v1725 = vpop.f32.mrf.mxu0
    %v1726 = vadd.f32 %v1703, %v1725
    %1727 = vmatmul.f32.gmra.mxu0 %v779
    %v1728 = vpop.f32.mrf.mxu0
    %v1729 = vadd.f32 %v1706, %v1728
    %1730 = vdwg.mxu0
    %1731 = vmatpush.msra.mxu0 %v974
    %1732 = vmatpush.msra.mxu0 %v972
    %1733 = vmatpush.msra.mxu0 %v970
    %1734 = vmatpush.msra.mxu0 %v968
    %1735 = vmatpush.msra.mxu0 %v966
    %1736 = vmatpush.msra.mxu0 %v964
    %1737 = vmatpush.msra.mxu0 %v962
    %1738 = vmatpush.msra.mxu0 %v960
    %1739 = vmatpush.msra.mxu0 %v958
    %1740 = vmatpush.msra.mxu0 %v956
    %1741 = vmatpush.msra.mxu0 %v954
    %1742 = vmatpush.msra.mxu0 %v952
    %1743 = vmatpush.msra.mxu0 %v950
    %1744 = vmatpush.msra.mxu0 %v948
    %1745 = vmatpush.msra.mxu0 %v946
    %1746 = vmatpush.msra.mxu0 %v944
    %1747 = vmatmul.f32.gmra.mxu0 %v764
    %v1748 = vpop.f32.mrf.mxu0
    %v1749 = vadd.f32 %v1726, %v1748
    %1750 = vmatmul.f32.gmra.mxu0 %v780
    %v1751 = vpop.f32.mrf.mxu0
    %v1752 = vadd.f32 %v1729, %v1751
    %1753 = vdwg.mxu0
    %1754 = vmatpush.msra.mxu0 %v1006
    %1755 = vmatpush.msra.mxu0 %v1004
    %1756 = vmatpush.msra.mxu0 %v1002
    %1757 = vmatpush.msra.mxu0 %v1000
    %1758 = vmatpush.msra.mxu0 %v998
    %1759 = vmatpush.msra.mxu0 %v996
    %1760 = vmatpush.msra.mxu0 %v994
    %1761 = vmatpush.msra.mxu0 %v992
    %1762 = vmatpush.msra.mxu0 %v990
    %1763 = vmatpush.msra.mxu0 %v988
    %1764 = vmatpush.msra.mxu0 %v986
    %1765 = vmatpush.msra.mxu0 %v984
    %1766 = vmatpush.msra.mxu0 %v982
    %1767 = vmatpush.msra.mxu0 %v980
    %1768 = vmatpush.msra.mxu0 %v978
    %1769 = vmatpush.msra.mxu0 %v976
    %1770 = vmatmul.f32.gmra.mxu0 %v765
    %v1771 = vpop.f32.mrf.mxu0
    %v1772 = vadd.f32 %v1749, %v1771
    %1773 = vmatmul.f32.gmra.mxu0 %v781
    %v1774 = vpop.f32.mrf.mxu0
    %v1775 = vadd.f32 %v1752, %v1774
    %1776 = vdwg.mxu0
    %1777 = vmatpush.msra.mxu0 %v1038
    %1778 = vmatpush.msra.mxu0 %v1036
    %1779 = vmatpush.msra.mxu0 %v1034
    %1780 = vmatpush.msra.mxu0 %v1032
    %1781 = vmatpush.msra.mxu0 %v1030
    %1782 = vmatpush.msra.mxu0 %v1028
    %1783 = vmatpush.msra.mxu0 %v1026
    %1784 = vmatpush.msra.mxu0 %v1024
    %1785 = vmatpush.msra.mxu0 %v1022
    %1786 = vmatpush.msra.mxu0 %v1020
    %1787 = vmatpush.msra.mxu0 %v1018
    %1788 = vmatpush.msra.mxu0 %v1016
    %1789 = vmatpush.msra.mxu0 %v1014
    %1790 = vmatpush.msra.mxu0 %v1012
    %1791 = vmatpush.msra.mxu0 %v1010
    %1792 = vmatpush.msra.mxu0 %v1008
    %1793 = vmatmul.f32.gmra.mxu0 %v766
    %v1794 = vpop.f32.mrf.mxu0
    %v1795 = vadd.f32 %v1772, %v1794
    %1796 = vmatmul.f32.gmra.mxu0 %v782
    %v1797 = vpop.f32.mrf.mxu0
    %v1798 = vadd.f32 %v1775, %v1797
    %1799 = vdwg.mxu0
    %v1800 = vmul.f32 %v1611, %v1039
    %v1801 = vmul.f32 %v1795, %v1040
    %v1802 = vmul.f32 %v1614, %v1041
    %v1803 = vmul.f32 %v1798, %v1042
    %v1804 = vadd.f32 %v1800, %v1802
    %v1805 = vrot.slane %v1804, 4
    %v1806 = vadd.f32 %v1804, %v1805
    %v1807 = vrot.slane %v1806, 2
    %v1808 = vadd.f32 %v1806, %v1807
    %v1809 = vrot.slane %v1808, 1
    %v1810 = vadd.f32 %v1808, %v1809
    %v1811 = vsel %vm1422, %v1801, 0.0
    %v1812 = vsel %vm1422, %v1803, 0.0
    %v1813 = vadd.f32 %v1811, %v1812
    %v1814 = vrot.slane %v1813, 4
    %v1815 = vadd.f32 %v1813, %v1814
    %v1816 = vrot.slane %v1815, 2
    %v1817 = vadd.f32 %v1815, %v1816
    %v1818 = vrot.slane %v1817, 1
    %v1819 = vadd.f32 %v1817, %v1818
    %vm1820 = vcmask 1040384
    %v1821 = vsel %vm1820, %v1421, %v1810
    %v1822 = vsel %vm1820, %v1431, %v1819
    %v1823 = vld [vmem:[%s6] sm:$0xff]
    %v1824 = vld [vmem:[%s6 + $0x8] sm:$0xff]
    %v1825 = vld [vmem:[%s6 + $0x10] sm:$0xff]
    %v1826 = vld [vmem:[%s6 + $0x18] sm:$0xff]
    %v1827 = vld [vmem:[%s6 + $0x20] sm:$0xff]
    %v1828 = vld [vmem:[%s6 + $0x28] sm:$0xff]
    %v1829 = vld [vmem:[%s6 + $0x30] sm:$0xff]
    %v1830 = vld [vmem:[%s6 + $0x38] sm:$0xff]
    %v1831 = vld [vmem:[%s6 + $0x40] sm:$0xff]
    %v1832 = vld [vmem:[%s6 + $0x48] sm:$0xff]
    %v1833 = vld [vmem:[%s6 + $0x50] sm:$0xff]
    %v1834 = vld [vmem:[%s6 + $0x58] sm:$0xff]
    %v1835 = vld [vmem:[%s6 + $0x60] sm:$0xff]
    %v1836 = vld [vmem:[%s6 + $0x68] sm:$0xff]
    %v1837 = vld [vmem:[%s6 + $0x70] sm:$0xff]
    %v1838 = vld [vmem:[%s6 + $0x78] sm:$0xff]
    %v1839 = vld [vmem:[%s6 + $0x80] sm:$0xff]
    %v1840 = vld [vmem:[%s6 + $0x88] sm:$0xff]
    %v1841 = vld [vmem:[%s6 + $0x90] sm:$0xff]
    %v1842 = vld [vmem:[%s6 + $0x98] sm:$0xff]
    %v1843 = vld [vmem:[%s7] sm:$0x1]
    %v1845 = vperm.slane %v1843, 0
    %v1848 = vsel %vm1422, %v1822, 0
    %1850 = vmatpush.msra.mxu0 %v1838
    %1851 = vmatpush.msra.mxu0 %v1837
    %1852 = vmatpush.msra.mxu0 %v1836
    %1853 = vmatpush.msra.mxu0 %v1835
    %1854 = vmatpush.msra.mxu0 %v1834
    %1855 = vmatpush.msra.mxu0 %v1833
    %1856 = vmatpush.msra.mxu0 %v1832
    %1857 = vmatpush.msra.mxu0 %v1831
    %1858 = vmatpush.msra.mxu0 %v1830
    %1859 = vmatpush.msra.mxu0 %v1829
    %1860 = vmatpush.msra.mxu0 %v1828
    %1861 = vmatpush.msra.mxu0 %v1827
    %1862 = vmatpush.msra.mxu0 %v1826
    %1863 = vmatpush.msra.mxu0 %v1825
    %1864 = vmatpush.msra.mxu0 %v1824
    %1865 = vmatpush.msra.mxu0 %v1823
    %1866 = vmatmul.f32.gmra.mxu0 %v1821
    %v1867 = vpop.f32.mrf.mxu0
    %v1868 = vadd.f32 %v1845, %v1867
    %1869 = vdwg.mxu0
    %1870 = vmatpush.msra.mxu0 0.0
    %1871 = vmatpush.msra.mxu0 0.0
    %1872 = vmatpush.msra.mxu0 0.0
    %1873 = vmatpush.msra.mxu0 0.0
    %1874 = vmatpush.msra.mxu0 0.0
    %1875 = vmatpush.msra.mxu0 0.0
    %1876 = vmatpush.msra.mxu0 0.0
    %1877 = vmatpush.msra.mxu0 0.0
    %1878 = vmatpush.msra.mxu0 0.0
    %1879 = vmatpush.msra.mxu0 0.0
    %1880 = vmatpush.msra.mxu0 0.0
    %1881 = vmatpush.msra.mxu0 0.0
    %1882 = vmatpush.msra.mxu0 %v1842
    %1883 = vmatpush.msra.mxu0 %v1841
    %1884 = vmatpush.msra.mxu0 %v1840
    %1885 = vmatpush.msra.mxu0 %v1839
    %1886 = vmatmul.f32.gmra.mxu0 %v1848
    %v1887 = vpop.f32.mrf.mxu0
    %v1888 = vadd.f32 %v1868, %v1887
    %1889 = vdwg.mxu0
    %vm1890 = vcmask 74752
    %1891 = vst.msk [vmem:[#allocation2] sm:$0x3] %vm1890, %v1888
    // Predicated region
    $region34: #{forward.1} parent=1 // pred_check
      _
    $region35: #{forward.1} parent=1 // pred_check_branch
      %1893 = sbr.rel (0) target = $region37
    $region36: #{forward.1} parent=1 // pred_region
      %1895 = vsyncadd [#allocation3], 0
      %s1897 = sshll.u32 [#allocation2], 4
      %s1898 = int_to_ptr.vmem [resolvable:$true] %s1897
      %s1899 = sshll.u32 %s8, 4
      %s1900 = int_to_ptr.hbm [resolvable:$true] %s1899
      %1902 = dma.vmem_to_hbm [thread:$0]  %s1898, 32, %s1900, [#allocation3]
    $region37: #{forward.1} parent=1 // pred_fallthru
      _
    // Predicated region
    $region38: #{forward.1} parent=1 // pred_check
      _
    $region39: #{forward.1} parent=1 // pred_check_branch
      %1904 = sbr.rel (0) target = $region41
    $region40: #{forward.1} parent=1 // pred_region
      %1906 = dma.done [#allocation3], 32
    $region41: #{forward.1} parent=1 // pred_fallthru
      _
    %1907 = vsyncpa [#allocation3], 1

</llo_original>
